<compile_context>
chip_gen: v7x
topology: tpu7x:2x2x1
jax: 0.10.0
libtpu: 0.0.40
codegen_flags: <defaults>
</compile_context>

<pallas_src>
import functools
import math

import jax
import jax.numpy as jnp
from jax.experimental import pallas as pl
from jax.experimental.pallas import tpu as pltpu


_VMEM_LIMIT = 48 * 1024 * 1024   # explicit scoped-VMEM budget (v7x-safe)
_LN_EPS = 1e-5                   # torch.nn.LayerNorm default


# ----------------------------- helpers -----------------------------

def _round_up(x, m):
    return (x + m - 1) // m * m


def _row_tile(m):
    """Row tile capped at 256 (v7x 64 MiB VMEM); rows are padded up to it."""
    if m >= 256:
        return 256
    return _round_up(m, 8)


def _seq_tile(s):
    for t in (256, 128):
        if s % t == 0:
            return t
    # TODO(synk): non-128-multiple sequence lengths fall back to a single
    # full-S K/V block; padding S would need key masking in the online softmax.
    return s


def _pad_dim(a, axis, mult):
    pad = (-a.shape[axis]) % mult
    if pad == 0:
        return a
    widths = [(0, 0)] * a.ndim
    widths[axis] = (0, pad)
    return jnp.pad(a, widths)


def _pad_rows(x2d, m_pad):
    m = x2d.shape[0]
    if m == m_pad:
        return x2d
    return jnp.pad(x2d, ((0, m_pad - m), (0, 0)))


def _layernorm(x, g, b):
    mean = jnp.mean(x, axis=-1, keepdims=True)
    var = jnp.mean((x - mean) ** 2, axis=-1, keepdims=True)
    return (x - mean) * jax.lax.rsqrt(var + _LN_EPS) * g + b


def _cp(sem):
    return pltpu.CompilerParams(dimension_semantics=sem,
                                vmem_limit_bytes=_VMEM_LIMIT)


# ----------------------------- Pallas kernels -----------------------------

def _mlp_kernel(x_ref, w1_ref, b1_ref, w2_ref, b2_ref, o_ref):
    """y = relu(x@W1+b1)@W2+b2 — bf16 matmul operands, f32 accumulation."""
    x = x_ref[...].astype(jnp.bfloat16)
    h = jnp.dot(x, w1_ref[...], preferred_element_type=jnp.float32) + b1_ref[...]
    h = jnp.maximum(h, 0.0)
    y = jnp.dot(h.astype(jnp.bfloat16), w2_ref[...],
                preferred_element_type=jnp.float32) + b2_ref[...]
    o_ref[...] = y.astype(o_ref.dtype)


def _ln_mlp_kernel(x_ref, g_ref, b_ref, w1_ref, b1_ref, w2_ref, b2_ref, o_ref):
    """y = MLP(LayerNorm(x)) — LN stats in f32, bf16 matmul operands."""
    x = x_ref[...].astype(jnp.float32)
    h = _layernorm(x, g_ref[...], b_ref[...])
    h = jnp.dot(h.astype(jnp.bfloat16), w1_ref[...],
                preferred_element_type=jnp.float32) + b1_ref[...]
    h = jnp.maximum(h, 0.0)
    y = jnp.dot(h.astype(jnp.bfloat16), w2_ref[...],
                preferred_element_type=jnp.float32) + b2_ref[...]
    o_ref[...] = y.astype(o_ref.dtype)


def _ln_qkv_kernel(x_ref, g_ref, b_ref, w_ref, wb_ref,
                   oq_ref, ok_ref, ov_ref, *, model_dim):
    """q,k,v = split(LayerNorm(x) @ [Wq|Wk|Wv] + b), emitted as bf16."""
    x = x_ref[...].astype(jnp.float32)
    h = _layernorm(x, g_ref[...], b_ref[...])
    y = jnp.dot(h.astype(jnp.bfloat16), w_ref[...],
                preferred_element_type=jnp.float32) + wb_ref[...]
    d = model_dim
    oq_ref[...] = y[:, :d].astype(oq_ref.dtype)
    ok_ref[...] = y[:, d:2 * d].astype(ok_ref.dtype)
    ov_ref[...] = y[:, 2 * d:].astype(ov_ref.dtype)


def _attn_layer_kernel(q_ref, k_ref, v_ref, xr_ref,
                       wo_ref, bo_ref, g2_ref, beta2_ref, g3_ref, beta3_ref,
                       w1_ref, b1_ref, w2_ref, b2_ref,
                       o_ref, m_sc, l_sc, acc_sc,
                       *, num_heads, head_dim, scale):
    """Per (batch, q-tile): online-softmax attention over K/V tiles, then
    (on the last K/V step) out-proj (folded per head, no concat) + LN2 +
    residual + LN3 + MLP + residual."""
    ki = pl.program_id(2)

    @pl.when(ki == 0)
    def _init():
        m_sc[...] = jnp.full(m_sc.shape, -jnp.inf, jnp.float32)
        l_sc[...] = jnp.zeros(l_sc.shape, jnp.float32)
        acc_sc[...] = jnp.zeros(acc_sc.shape, jnp.float32)

    q = q_ref[0]                                   # (tq, D) bf16
    k = k_ref[0]                                   # (tk, D) bf16
    v = v_ref[0]                                   # (tk, D) bf16
    for h in range(num_heads):
        lo = h * head_dim
        q_h = q[:, lo:lo + head_dim]
        k_h = k[:, lo:lo + head_dim]
        v_h = v[:, lo:lo + head_dim]
        # q @ k^T via contraction of the last dims (no explicit transpose)
        s = jax.lax.dot_general(q_h, k_h, (((1,), (1,)), ((), ())),
                                preferred_element_type=jnp.float32) * scale
        m_prev = m_sc[h]
        m_new = jnp.maximum(m_prev, jnp.max(s, axis=-1, keepdims=True))
        alpha = jnp.exp(m_prev - m_new)
        p = jnp.exp(s - m_new)
        l_sc[h] = alpha * l_sc[h] + jnp.sum(p, axis=-1, keepdims=True)
        acc_sc[h] = alpha * acc_sc[h] + jnp.dot(
            p.astype(v_h.dtype), v_h, preferred_element_type=jnp.float32)
        m_sc[h] = m_new

    @pl.when(ki == pl.num_programs(2) - 1)
    def _finalize():
        # out-projection folded per head into an f32 accumulator (no concat)
        attn = bo_ref[...].astype(jnp.float32)                   # (1, D)
        for h in range(num_heads):
            o_h = acc_sc[h] * pl.reciprocal(l_sc[h], approx=True)
            attn = attn + jnp.dot(
                o_h.astype(jnp.bfloat16),
                wo_ref[h * head_dim:(h + 1) * head_dim, :],
                preferred_element_type=jnp.float32)
        y = _layernorm(attn, g2_ref[...], beta2_ref[...])        # Normformer LN2
        x1 = xr_ref[0].astype(jnp.float32) + y                   # residual 1
        hmid = _layernorm(x1, g3_ref[...], beta3_ref[...])       # LN3
        hmid = jnp.dot(hmid.astype(jnp.bfloat16), w1_ref[...],
                       preferred_element_type=jnp.float32) + b1_ref[...]
        hmid = jnp.maximum(hmid, 0.0)
        mlp = jnp.dot(hmid.astype(jnp.bfloat16), w2_ref[...],
                      preferred_element_type=jnp.float32) + b2_ref[...]
        o_ref[0] = (x1 + mlp).astype(o_ref.dtype)                # residual 2


# ----------------------------- kernel wrappers -----------------------------

def node_embd_forward(x2d, p):
    m = x2d.shape[0]
    xp = _pad_dim(x2d, 1, 128)                    # lane-dense K for 1st matmul
    w1 = _pad_dim(p["l1"]["w"], 0, 128)           # matching zero rows
    din = xp.shape[1]
    hid = w1.shape[1]
    dout = p["l2"]["w"].shape[1]
    tm = _row_tile(m)
    mp = _round_up(m, tm)
    xp = _pad_rows(xp, mp)
    out = pl.pallas_call(
        _mlp_kernel,
        out_shape=jax.ShapeDtypeStruct((mp, dout), jnp.float32),
        grid=(mp // tm,),
        in_specs=[
            pl.BlockSpec((tm, din), lambda i: (i, 0)),
            pl.BlockSpec((din, hid), lambda i: (0, 0)),
            pl.BlockSpec((1, hid), lambda i: (0, 0)),
            pl.BlockSpec((hid, dout), lambda i: (0, 0)),
            pl.BlockSpec((1, dout), lambda i: (0, 0)),
        ],
        out_specs=pl.BlockSpec((tm, dout), lambda i: (i, 0)),
        compiler_params=_cp(("parallel",)),
    )(xp, w1, p["l1"]["b"].reshape(1, hid),
      p["l2"]["w"], p["l2"]["b"].reshape(1, dout))
    return out[:m]


def outp_embd_forward(x2d, ln, p, outp_dim):
    m, d = x2d.shape
    hid = p["l1"]["w"].shape[1]
    w2 = _pad_dim(p["l2"]["w"], 1, 128)           # lane-dense output stores
    b2 = _pad_dim(p["l2"]["b"], 0, 128)
    dp = w2.shape[1]
    tm = _row_tile(m)
    mp = _round_up(m, tm)
    xp = _pad_rows(x2d, mp)
    out = pl.pallas_call(
        _ln_mlp_kernel,
        out_shape=jax.ShapeDtypeStruct((mp, dp), jnp.float32),
        grid=(mp // tm,),
        in_specs=[
            pl.BlockSpec((tm, d), lambda i: (i, 0)),
            pl.BlockSpec((1, d), lambda i: (0, 0)),
            pl.BlockSpec((1, d), lambda i: (0, 0)),
            pl.BlockSpec((d, hid), lambda i: (0, 0)),
            pl.BlockSpec((1, hid), lambda i: (0, 0)),
            pl.BlockSpec((hid, dp), lambda i: (0, 0)),
            pl.BlockSpec((1, dp), lambda i: (0, 0)),
        ],
        out_specs=pl.BlockSpec((tm, dp), lambda i: (i, 0)),
        compiler_params=_cp(("parallel",)),
    )(xp, ln["g"].reshape(1, d), ln["b"].reshape(1, d),
      p["l1"]["w"], p["l1"]["b"].reshape(1, hid), w2, b2.reshape(1, dp))
    return out[:m, :outp_dim]


def fused_ln_qkv(x2d, ln, wqkv, bqkv):
    m, d = x2d.shape
    d3 = wqkv.shape[1]
    tm = _row_tile(m)
    mp = _round_up(m, tm)
    xp = _pad_rows(x2d, mp)
    q, k, v = pl.pallas_call(
        functools.partial(_ln_qkv_kernel, model_dim=d),
        out_shape=tuple(jax.ShapeDtypeStruct((mp, d), jnp.bfloat16)
                        for _ in range(3)),
        grid=(mp // tm,),
        in_specs=[
            pl.BlockSpec((tm, d), lambda i: (i, 0)),
            pl.BlockSpec((1, d), lambda i: (0, 0)),
            pl.BlockSpec((1, d), lambda i: (0, 0)),
            pl.BlockSpec((d, d3), lambda i: (0, 0)),
            pl.BlockSpec((1, d3), lambda i: (0, 0)),
        ],
        out_specs=tuple(pl.BlockSpec((tm, d), lambda i: (i, 0))
                        for _ in range(3)),
        compiler_params=_cp(("parallel",)),
    )(xp, ln["g"].reshape(1, d), ln["b"].reshape(1, d), wqkv,
      bqkv.reshape(1, d3))
    return q[:m], k[:m], v[:m]


def fused_attn_layer(q, k, v, x, lp, *, num_heads):
    b, s, d = x.shape
    hd = d // num_heads
    hid = lp["dense"]["l1"]["w"].shape[1]
    tq = _seq_tile(s)
    tk = _seq_tile(s)
    nq = s // tq
    nk = s // tk
    mha = lp["mha"]
    kern = functools.partial(_attn_layer_kernel, num_heads=num_heads,
                             head_dim=hd, scale=1.0 / math.sqrt(hd))
    return pl.pallas_call(
        kern,
        out_shape=jax.ShapeDtypeStruct((b, s, d), x.dtype),
        grid=(b, nq, nk),
        in_specs=[
            pl.BlockSpec((1, tq, d), lambda bi, qi, ki: (bi, qi, 0)),   # q
            pl.BlockSpec((1, tk, d), lambda bi, qi, ki: (bi, ki, 0)),   # k
            pl.BlockSpec((1, tk, d), lambda bi, qi, ki: (bi, ki, 0)),   # v
            pl.BlockSpec((1, tq, d), lambda bi, qi, ki: (bi, qi, 0)),   # resid x
            pl.BlockSpec((d, d), lambda bi, qi, ki: (0, 0)),            # Wo
            pl.BlockSpec((1, d), lambda bi, qi, ki: (0, 0)),            # bo
            pl.BlockSpec((1, d), lambda bi, qi, ki: (0, 0)),            # ln2 g
            pl.BlockSpec((1, d), lambda bi, qi, ki: (0, 0)),            # ln2 b
            pl.BlockSpec((1, d), lambda bi, qi, ki: (0, 0)),            # ln3 g
            pl.BlockSpec((1, d), lambda bi, qi, ki: (0, 0)),            # ln3 b
            pl.BlockSpec((d, hid), lambda bi, qi, ki: (0, 0)),          # W1
            pl.BlockSpec((1, hid), lambda bi, qi, ki: (0, 0)),          # b1
            pl.BlockSpec((hid, d), lambda bi, qi, ki: (0, 0)),          # W2
            pl.BlockSpec((1, d), lambda bi, qi, ki: (0, 0)),            # b2
        ],
        out_specs=pl.BlockSpec((1, tq, d), lambda bi, qi, ki: (bi, qi, 0)),
        scratch_shapes=[
            pltpu.VMEM((num_heads, tq, 1), jnp.float32),   # running max
            pltpu.VMEM((num_heads, tq, 1), jnp.float32),   # running denom
            pltpu.VMEM((num_heads, tq, hd), jnp.float32),  # running p@v acc
        ],
        input_output_aliases={3: 0},   # residual stream reuses the x buffer
        compiler_params=_cp(("parallel", "parallel", "arbitrary")),
    )(q, k, v, x,
      mha["out"]["w"], mha["out"]["b"].reshape(1, d),
      lp["ln2"]["g"].reshape(1, d), lp["ln2"]["b"].reshape(1, d),
      lp["ln3"]["g"].reshape(1, d), lp["ln3"]["b"].reshape(1, d),
      lp["dense"]["l1"]["w"], lp["dense"]["l1"]["b"].reshape(1, hid),
      lp["dense"]["l2"]["w"], lp["dense"]["l2"]["b"].reshape(1, d))


# ----------------------------- parameter init -----------------------------

def init_linear_params(key, din, dout):
    kw, kb = jax.random.split(key)
    lim = 1.0 / math.sqrt(din)               # torch nn.Linear default init
    w = jax.random.uniform(kw, (din, dout), jnp.float32, -lim, lim)
    b = jax.random.uniform(kb, (dout,), jnp.float32, -lim, lim)
    return {"w": w.astype(jnp.bfloat16), "b": b}   # bf16 weights, f32 biases


def init_dense_net(key, din, dout, hidden):
    k1, k2 = jax.random.split(key)
    return {"l1": init_linear_params(k1, din, hidden),
            "l2": init_linear_params(k2, hidden, dout)}


def init_layernorm_params(dim):
    return {"g": jnp.ones((dim,), jnp.float32),
            "b": jnp.zeros((dim,), jnp.float32)}


def init_params(key, *, inpt_dim, outp_dim, model_dim, num_layers, num_heads,
                hidden):
    assert model_dim % num_heads == 0, "model_dim must divide by num_heads"
    keys = jax.random.split(key, 2 + num_layers)
    params = {
        "node_embd": init_dense_net(keys[0], inpt_dim, model_dim, hidden),
        "outp_embd": init_dense_net(keys[1], model_dim, outp_dim, hidden),
        "final_norm": init_layernorm_params(model_dim),
        "layers": [],
    }
    for i in range(num_layers):
        lk = jax.random.split(keys[2 + i], 5)
        q = init_linear_params(lk[0], model_dim, model_dim)
        k = init_linear_params(lk[1], model_dim, model_dim)
        v = init_linear_params(lk[2], model_dim, model_dim)
        lp = {
            "ln1": init_layernorm_params(model_dim),
            "ln2": init_layernorm_params(model_dim),
            "ln3": init_layernorm_params(model_dim),
            "mha": {
                # merged QKV projection: [Wq | Wk | Wv]  (D, 3D), bf16
                "wqkv": jnp.concatenate([q["w"], k["w"], v["w"]], axis=1),
                "bqkv": jnp.concatenate([q["b"], k["b"], v["b"]], axis=0),
                "out": init_linear_params(lk[3], model_dim, model_dim),
            },
            "dense": init_dense_net(lk[4], model_dim, model_dim, hidden),
        }
        params["layers"].append(lp)
    return params


# ----------------------------- forward pass -----------------------------

def encoder_layer(x, lp, num_heads):
    """Normformer layer: x + norm2(attn(norm1(x))); then x + dense(norm3(x))."""
    b, s, d = x.shape
    q, k, v = fused_ln_qkv(x.reshape(b * s, d), lp["ln1"],
                           lp["mha"]["wqkv"], lp["mha"]["bqkv"])
    q = q.reshape(b, s, d)
    k = k.reshape(b, s, d)
    v = v.reshape(b, s, d)
    return fused_attn_layer(q, k, v, x, lp, num_heads=num_heads)


def full_transformer_encoder(x, params, *, num_heads):
    """x: (B, S, inpt_dim) -> (B, S, outp_dim)."""
    b, s, f = x.shape
    h = node_embd_forward(x.reshape(b * s, f), params["node_embd"])
    d = h.shape[-1]
    h = h.reshape(b, s, d)
    for lp in params["layers"]:
        h = encoder_layer(h, lp, num_heads)
    outp_dim = params["outp_embd"]["l2"]["w"].shape[1]
    out = outp_embd_forward(h.reshape(b * s, d), params["final_norm"],
                            params["outp_embd"], outp_dim)
    return out.reshape(b, s, outp_dim)


# ----------------------------- pure-JAX reference -----------------------------

def reference_forward(x, params, *, num_heads):
    f32 = jnp.float32

    def dense(x2, p):
        h = x2 @ p["l1"]["w"].astype(f32) + p["l1"]["b"]
        h = jnp.maximum(h, 0.0)
        return h @ p["l2"]["w"].astype(f32) + p["l2"]["b"]

    def ln(t, g, b):
        mu = t.mean(-1, keepdims=True)
        var = ((t - mu) ** 2).mean(-1, keepdims=True)
        return (t - mu) / jnp.sqrt(var + _LN_EPS) * g + b

    bsz, s, feat = x.shape
    h = dense(x.reshape(bsz * s, feat), params["node_embd"])
    d = h.shape[-1]
    hd = d // num_heads
    h = h.reshape(bsz, s, d)
    for lp in params["layers"]:
        n1 = ln(h, lp["ln1"]["g"], lp["ln1"]["b"])
        qkv = n1 @ lp["mha"]["wqkv"].astype(f32) + lp["mha"]["bqkv"]
        q, k, v = jnp.split(qkv, 3, axis=-1)

        def split_heads(t):
            return t.reshape(bsz, s, num_heads, hd).transpose(0, 2, 1, 3)

        qh, kh, vh = split_heads(q), split_heads(k), split_heads(v)
        scores = jnp.einsum("bhqd,bhkd->bhqk", qh, kh) / math.sqrt(hd)
        probs = jax.nn.softmax(scores, axis=-1)
        attn = jnp.einsum("bhqk,bhkd->bhqd", probs, vh)
        attn = attn.transpose(0, 2, 1, 3).reshape(bsz, s, d)
        attn = attn @ lp["mha"]["out"]["w"].astype(f32) + lp["mha"]["out"]["b"]
        h = h + ln(attn, lp["ln2"]["g"], lp["ln2"]["b"])
        h = h + dense(ln(h, lp["ln3"]["g"], lp["ln3"]["b"]).reshape(bsz * s, d),
                      lp["dense"]).reshape(bsz, s, d)
    out = dense(ln(h, params["final_norm"]["g"],
                   params["final_norm"]["b"]).reshape(bsz * s, d),
                params["outp_embd"])
    return out.reshape(bsz, s, -1)


# ----------------------------- main -----------------------------

if __name__ == "__main__":
    # Small config consistent with the module defaults (scaled down).
    B, S = 2, 8
    INPT_DIM, OUTP_DIM = 4, 6
    MODEL_DIM, NUM_LAYERS, NUM_HEADS = 32, 2, 2
    HIDDEN = MODEL_DIM   # hidden width of the (assumed) DenseNetwork MLPs

    key = jax.random.PRNGKey(0)
    k_param, k_x = jax.random.split(key)

    params = init_params(k_param,
                         inpt_dim=INPT_DIM, outp_dim=OUTP_DIM,
                         model_dim=MODEL_DIM, num_layers=NUM_LAYERS,
                         num_heads=NUM_HEADS, hidden=HIDDEN)

    x = jax.random.normal(k_x, (B, S, INPT_DIM), dtype=jnp.float32)

    fwd = jax.jit(functools.partial(full_transformer_encoder,
                                    num_heads=NUM_HEADS))
    out = jax.block_until_ready(fwd(x, params))

    assert out.shape == (B, S, OUTP_DIM)
    assert bool(jnp.all(jnp.isfinite(out)))

    # Loose-tolerance check against a pure-JAX f32 reference (kernel uses bf16
    # matmul operands + approx softmax reciprocal, so exact match not expected).
    ref = reference_forward(x, params, num_heads=NUM_HEADS)
    err = float(jnp.max(jnp.abs(out - ref)))
    assert err < 2e-1, f"kernel deviates from reference: max abs err {err}"

    print("KERNEL_OK")
</pallas_src>

<mosaic_0001>
module attributes {stable_mosaic.version = 11 : i64} {
  func.func @_mlp_kernel(%arg0: i32, %arg1: memref<16x128xf32, #tpu.memory_space<vmem>>, %arg2: memref<128x32xbf16, #tpu.memory_space<vmem>>, %arg3: memref<1x32xf32, #tpu.memory_space<vmem>>, %arg4: memref<32x32xbf16, #tpu.memory_space<vmem>>, %arg5: memref<1x32xf32, #tpu.memory_space<vmem>>, %arg6: memref<16x32xf32, #tpu.memory_space<vmem>>) attributes {dimension_semantics = [#tpu.dimension_semantics<parallel>], iteration_bounds = array<i64: 1>, scalar_prefetch = 0 : i64, scratch_operands = 0 : i64, tpu.core_type = #tpu.core_type<tc>, window_params = [{transform_indices = @transform_0, window_bounds = array<i64: 16, 128>}, {pipeline_mode = #tpu.pipeline_mode<synchronous>, transform_indices = @transform_1, window_bounds = array<i64: 128, 32>}, {pipeline_mode = #tpu.pipeline_mode<synchronous>, transform_indices = @transform_2, window_bounds = array<i64: 1, 32>}, {pipeline_mode = #tpu.pipeline_mode<synchronous>, transform_indices = @transform_3, window_bounds = array<i64: 32, 32>}, {pipeline_mode = #tpu.pipeline_mode<synchronous>, transform_indices = @transform_4, window_bounds = array<i64: 1, 32>}, {transform_indices = @transform_5, window_bounds = array<i64: 16, 32>}]} {
    %c0 = arith.constant 0 : index
    %c0_0 = arith.constant 0 : index
    %0 = vector.load %arg1[%c0, %c0_0] : memref<16x128xf32, #tpu.memory_space<vmem>>, vector<16x128xf32>
    %1 = arith.truncf %0 : vector<16x128xf32> to vector<16x128xbf16>
    %c0_1 = arith.constant 0 : index
    %c0_2 = arith.constant 0 : index
    %2 = vector.load %arg2[%c0_1, %c0_2] : memref<128x32xbf16, #tpu.memory_space<vmem>>, vector<128x32xbf16>
    %cst = arith.constant dense<0.000000e+00> : vector<16x32xf32>
    %3 = tpu.matmul %1, %2, %cst {dimension_numbers = #tpu.dot_dimension_numbers<[1], [0], [0], [1], [0, 0, 1, 1], [], []>} : vector<16x128xbf16>, vector<128x32xbf16>, vector<16x32xf32> -> vector<16x32xf32>
    %c0_3 = arith.constant 0 : index
    %c0_4 = arith.constant 0 : index
    %4 = vector.load %arg3[%c0_3, %c0_4] : memref<1x32xf32, #tpu.memory_space<vmem>>, vector<1x32xf32>
    %5 = vector.broadcast %4 : vector<1x32xf32> to vector<16x32xf32>
    %6 = arith.addf %3, %5 : vector<16x32xf32>
    %cst_5 = arith.constant 0.000000e+00 : f32
    %7 = vector.broadcast %cst_5 : f32 to vector<16x32xf32>
    %8 = arith.maximumf %6, %7 : vector<16x32xf32>
    %9 = arith.truncf %8 : vector<16x32xf32> to vector<16x32xbf16>
    %c0_6 = arith.constant 0 : index
    %c0_7 = arith.constant 0 : index
    %10 = vector.load %arg4[%c0_6, %c0_7] : memref<32x32xbf16, #tpu.memory_space<vmem>>, vector<32x32xbf16>
    %cst_8 = arith.constant dense<0.000000e+00> : vector<16x32xf32>
    %11 = tpu.matmul %9, %10, %cst_8 {dimension_numbers = #tpu.dot_dimension_numbers<[1], [0], [0], [1], [0, 0, 1, 1], [], []>} : vector<16x32xbf16>, vector<32x32xbf16>, vector<16x32xf32> -> vector<16x32xf32>
    %c0_9 = arith.constant 0 : index
    %c0_10 = arith.constant 0 : index
    %12 = vector.load %arg5[%c0_9, %c0_10] : memref<1x32xf32, #tpu.memory_space<vmem>>, vector<1x32xf32>
    %13 = vector.broadcast %12 : vector<1x32xf32> to vector<16x32xf32>
    %14 = arith.addf %11, %13 : vector<16x32xf32>
    %c0_11 = arith.constant 0 : index
    %c0_12 = arith.constant 0 : index
    %15 = vector.load %arg6[%c0_11, %c0_12] : memref<16x32xf32, #tpu.memory_space<vmem>>, vector<16x32xf32>
    tpu.vector_store %arg6[%c0_11, %c0_12], %14 {strides = array<i32>} : memref<16x32xf32, #tpu.memory_space<vmem>>, vector<16x32xf32>,
    return
  }
  func.func @transform_0(%arg0: i32) -> (i32, i32) {
    %c0_i32 = arith.constant 0 : i32
    %c0_i32_0 = arith.constant 0 : i32
    return %arg0, %c0_i32 : i32, i32
  }
  func.func @transform_1(%arg0: i32) -> (i32, i32) {
    %c0_i32 = arith.constant 0 : i32
    %c0_i32_0 = arith.constant 0 : i32
    %c0_i32_1 = arith.constant 0 : i32
    return %c0_i32, %c0_i32_0 : i32, i32
  }
  func.func @transform_2(%arg0: i32) -> (i32, i32) {
    %c0_i32 = arith.constant 0 : i32
    %c0_i32_0 = arith.constant 0 : i32
    %c0_i32_1 = arith.constant 0 : i32
    return %c0_i32, %c0_i32_0 : i32, i32
  }
  func.func @transform_3(%arg0: i32) -> (i32, i32) {
    %c0_i32 = arith.constant 0 : i32
    %c0_i32_0 = arith.constant 0 : i32
    %c0_i32_1 = arith.constant 0 : i32
    return %c0_i32, %c0_i32_0 : i32, i32
  }
  func.func @transform_4(%arg0: i32) -> (i32, i32) {
    %c0_i32 = arith.constant 0 : i32
    %c0_i32_0 = arith.constant 0 : i32
    %c0_i32_1 = arith.constant 0 : i32
    return %c0_i32, %c0_i32_0 : i32, i32
  }
  func.func @transform_5(%arg0: i32) -> (i32, i32) {
    %c0_i32 = arith.constant 0 : i32
    %c0_i32_0 = arith.constant 0 : i32
    return %arg0, %c0_i32 : i32, i32
  }
}

module attributes {stable_mosaic.version = 11 : i64} {
  func.func @_attn_layer_kernel(%arg0: i32, %arg1: i32, %arg2: i32, %arg3: memref<1x8x32xbf16, #tpu.memory_space<vmem>>, %arg4: memref<1x8x32xbf16, #tpu.memory_space<vmem>>, %arg5: memref<1x8x32xbf16, #tpu.memory_space<vmem>>, %arg6: memref<1x8x32xf32, #tpu.memory_space<vmem>>, %arg7: memref<32x32xbf16, #tpu.memory_space<vmem>>, %arg8: memref<1x32xf32, #tpu.memory_space<vmem>>, %arg9: memref<1x32xf32, #tpu.memory_space<vmem>>, %arg10: memref<1x32xf32, #tpu.memory_space<vmem>>, %arg11: memref<1x32xf32, #tpu.memory_space<vmem>>, %arg12: memref<1x32xf32, #tpu.memory_space<vmem>>, %arg13: memref<32x32xbf16, #tpu.memory_space<vmem>>, %arg14: memref<1x32xf32, #tpu.memory_space<vmem>>, %arg15: memref<32x32xbf16, #tpu.memory_space<vmem>>, %arg16: memref<1x32xf32, #tpu.memory_space<vmem>>, %arg17: memref<1x8x32xf32, #tpu.memory_space<vmem>>, %arg18: memref<2x8x1xf32, #tpu.memory_space<vmem>>, %arg19: memref<2x8x1xf32, #tpu.memory_space<vmem>>, %arg20: memref<2x8x16xf32, #tpu.memory_space<vmem>>) attributes {dimension_semantics = [#tpu.dimension_semantics<parallel>, #tpu.dimension_semantics<parallel>, #tpu.dimension_semantics<arbitrary>], iteration_bounds = array<i64: 2, 1, 1>, scalar_prefetch = 0 : i64, scratch_operands = 3 : i64, tpu.core_type = #tpu.core_type<tc>, window_params = [{transform_indices = @transform_0, window_bounds = array<i64: 1, 8, 32>}, {transform_indices = @transform_1, window_bounds = array<i64: 1, 8, 32>}, {transform_indices = @transform_2, window_bounds = array<i64: 1, 8, 32>}, {transform_indices = @transform_3, window_bounds = array<i64: 1, 8, 32>}, {pipeline_mode = #tpu.pipeline_mode<synchronous>, transform_indices = @transform_4, window_bounds = array<i64: 32, 32>}, {pipeline_mode = #tpu.pipeline_mode<synchronous>, transform_indices = @transform_5, window_bounds = array<i64: 1, 32>}, {pipeline_mode = #tpu.pipeline_mode<synchronous>, transform_indices = @transform_6, window_bounds = array<i64: 1, 32>}, {pipeline_mode = #tpu.pipeline_mode<synchronous>, transform_indices = @transform_7, window_bounds = array<i64: 1, 32>}, {pipeline_mode = #tpu.pipeline_mode<synchronous>, transform_indices = @transform_8, window_bounds = array<i64: 1, 32>}, {pipeline_mode = #tpu.pipeline_mode<synchronous>, transform_indices = @transform_9, window_bounds = array<i64: 1, 32>}, {pipeline_mode = #tpu.pipeline_mode<synchronous>, transform_indices = @transform_10, window_bounds = array<i64: 32, 32>}, {pipeline_mode = #tpu.pipeline_mode<synchronous>, transform_indices = @transform_11, window_bounds = array<i64: 1, 32>}, {pipeline_mode = #tpu.pipeline_mode<synchronous>, transform_indices = @transform_12, window_bounds = array<i64: 32, 32>}, {pipeline_mode = #tpu.pipeline_mode<synchronous>, transform_indices = @transform_13, window_bounds = array<i64: 1, 32>}, {transform_indices = @transform_14, window_bounds = array<i64: 1, 8, 32>}]} {
    %c0_i32 = arith.constant 0 : i32
    %0 = arith.cmpi eq, %arg2, %c0_i32 : i32
    %1 = arith.extui %0 : i1 to i32
    %c0_i32_0 = arith.constant 0 : i32
    %2 = arith.cmpi ne, %1, %c0_i32_0 : i32
    scf.if %2 {
      %cst_55 = arith.constant 0xFF800000 : f32
      %88 = vector.broadcast %cst_55 : f32 to vector<2x8x1xf32>
      %c0_56 = arith.constant 0 : index
      %c0_57 = arith.constant 0 : index
      %c0_58 = arith.constant 0 : index
      %89 = vector.load %arg18[%c0_56, %c0_57, %c0_58] : memref<2x8x1xf32, #tpu.memory_space<vmem>>, vector<2x8x1xf32>
      tpu.vector_store %arg18[%c0_56, %c0_57, %c0_58], %88 {strides = array<i32>} : memref<2x8x1xf32, #tpu.memory_space<vmem>>, vector<2x8x1xf32>,
      %cst_59 = arith.constant 0.000000e+00 : f32
      %90 = vector.broadcast %cst_59 : f32 to vector<2x8x1xf32>
      %c0_60 = arith.constant 0 : index
      %c0_61 = arith.constant 0 : index
      %c0_62 = arith.constant 0 : index
      %91 = vector.load %arg19[%c0_60, %c0_61, %c0_62] : memref<2x8x1xf32, #tpu.memory_space<vmem>>, vector<2x8x1xf32>
      tpu.vector_store %arg19[%c0_60, %c0_61, %c0_62], %90 {strides = array<i32>} : memref<2x8x1xf32, #tpu.memory_space<vmem>>, vector<2x8x1xf32>,
      %cst_63 = arith.constant 0.000000e+00 : f32
      %92 = vector.broadcast %cst_63 : f32 to vector<2x8x16xf32>
      %c0_64 = arith.constant 0 : index
      %c0_65 = arith.constant 0 : index
      %c0_66 = arith.constant 0 : index
      %93 = vector.load %arg20[%c0_64, %c0_65, %c0_66] : memref<2x8x16xf32, #tpu.memory_space<vmem>>, vector<2x8x16xf32>
      tpu.vector_store %arg20[%c0_64, %c0_65, %c0_66], %92 {strides = array<i32>} : memref<2x8x16xf32, #tpu.memory_space<vmem>>, vector<2x8x16xf32>,
    } else {
    }
    %c0 = arith.constant 0 : index
    %c0_1 = arith.constant 0 : index
    %c0_2 = arith.constant 0 : index
    %3 = vector.load %arg3[%c0, %c0_1, %c0_2] : memref<1x8x32xbf16, #tpu.memory_space<vmem>>, vector<1x8x32xbf16>
    %4 = vector.shape_cast %3 : vector<1x8x32xbf16> to vector<8x32xbf16>
    %c0_3 = arith.constant 0 : index
    %c0_4 = arith.constant 0 : index
    %c0_5 = arith.constant 0 : index
    %5 = vector.load %arg4[%c0_3, %c0_4, %c0_5] : memref<1x8x32xbf16, #tpu.memory_space<vmem>>, vector<1x8x32xbf16>
    %6 = vector.shape_cast %5 : vector<1x8x32xbf16> to vector<8x32xbf16>
    %c0_6 = arith.constant 0 : index
    %c0_7 = arith.constant 0 : index
    %c0_8 = arith.constant 0 : index
    %7 = vector.load %arg5[%c0_6, %c0_7, %c0_8] : memref<1x8x32xbf16, #tpu.memory_space<vmem>>, vector<1x8x32xbf16>
    %8 = vector.shape_cast %7 : vector<1x8x32xbf16> to vector<8x32xbf16>
    %9 = vector.extract_strided_slice %4 {offsets = [0, 0], sizes = [8, 16], strides = [1, 1]} : vector<8x32xbf16> to vector<8x16xbf16>
    %10 = vector.extract_strided_slice %6 {offsets = [0, 0], sizes = [8, 16], strides = [1, 1]} : vector<8x32xbf16> to vector<8x16xbf16>
    %11 = vector.extract_strided_slice %8 {offsets = [0, 0], sizes = [8, 16], strides = [1, 1]} : vector<8x32xbf16> to vector<8x16xbf16>
    %cst = arith.constant dense<0.000000e+00> : vector<8x8xf32>
    %12 = tpu.matmul %9, %10, %cst {dimension_numbers = #tpu.dot_dimension_numbers<[1], [1], [0], [0], [0, 0, 1, 0], [], []>} : vector<8x16xbf16>, vector<8x16xbf16>, vector<8x8xf32> -> vector<8x8xf32>
    %cst_9 = arith.constant 2.500000e-01 : f32
    %13 = vector.broadcast %cst_9 : f32 to vector<8x8xf32>
    %14 = arith.mulf %12, %13 : vector<8x8xf32>
    %c0_10 = arith.constant 0 : index
    %c0_11 = arith.constant 0 : index
    %c0_12 = arith.constant 0 : index
    %15 = vector.load %arg18[%c0_10, %c0_11, %c0_12] : memref<2x8x1xf32, #tpu.memory_space<vmem>>, vector<1x8x1xf32>
    %16 = vector.shape_cast %15 : vector<1x8x1xf32> to vector<8x1xf32>
    %cst_13 = arith.constant dense<0xFF800000> : vector<8xf32>
    %17 = vector.multi_reduction <maximumf>, %14, %cst_13 [1] : vector<8x8xf32> to vector<8xf32>
    %18 = vector.shape_cast %17 : vector<8xf32> to vector<8x1xf32>
    %19 = arith.maximumf %16, %18 : vector<8x1xf32>
    %20 = arith.subf %16, %19 : vector<8x1xf32>
    %21 = math.exp %20 : vector<8x1xf32>
    %22 = vector.broadcast %19 : vector<8x1xf32> to vector<8x8xf32>
    %23 = arith.subf %14, %22 : vector<8x8xf32>
    %24 = math.exp %23 : vector<8x8xf32>
    %c0_14 = arith.constant 0 : index
    %c0_15 = arith.constant 0 : index
    %c0_16 = arith.constant 0 : index
    %25 = vector.load %arg19[%c0_14, %c0_15, %c0_16] : memref<2x8x1xf32, #tpu.memory_space<vmem>>, vector<1x8x1xf32>
    %26 = vector.shape_cast %25 : vector<1x8x1xf32> to vector<8x1xf32>
    %27 = arith.mulf %21, %26 : vector<8x1xf32>
    %cst_17 = arith.constant dense<0.000000e+00> : vector<8xf32>
    %28 = vector.multi_reduction <add>, %24, %cst_17 [1] : vector<8x8xf32> to vector<8xf32>
    %29 = vector.shape_cast %28 : vector<8xf32> to vector<8x1xf32>
    %30 = arith.addf %27, %29 : vector<8x1xf32>
    %c0_18 = arith.constant 0 : index
    %c0_19 = arith.constant 0 : index
    %c0_20 = arith.constant 0 : index
    %31 = vector.load %arg19[%c0_18, %c0_19, %c0_20] : memref<2x8x1xf32, #tpu.memory_space<vmem>>, vector<1x8x1xf32>
    %32 = vector.shape_cast %31 : vector<1x8x1xf32> to vector<8x1xf32>
    %33 = vector.shape_cast %30 : vector<8x1xf32> to vector<1x8x1xf32>
    tpu.vector_store %arg19[%c0_18, %c0_19, %c0_20], %33 {strides = array<i32>} : memref<2x8x1xf32, #tpu.memory_space<vmem>>, vector<1x8x1xf32>,
    %c0_21 = arith.constant 0 : index
    %c0_22 = arith.constant 0 : index
    %c0_23 = arith.constant 0 : index
    %34 = vector.load %arg20[%c0_21, %c0_22, %c0_23] : memref<2x8x16xf32, #tpu.memory_space<vmem>>, vector<1x8x16xf32>
    %35 = vector.shape_cast %34 : vector<1x8x16xf32> to vector<8x16xf32>
    %36 = vector.broadcast %21 : vector<8x1xf32> to vector<8x16xf32>
    %37 = arith.mulf %36, %35 : vector<8x16xf32>
    %38 = arith.truncf %24 : vector<8x8xf32> to vector<8x8xbf16>
    %cst_24 = arith.constant dense<0.000000e+00> : vector<8x16xf32>
    %39 = tpu.matmul %38, %11, %cst_24 {dimension_numbers = #tpu.dot_dimension_numbers<[1], [0], [0], [1], [0, 0, 1, 1], [], []>} : vector<8x8xbf16>, vector<8x16xbf16>, vector<8x16xf32> -> vector<8x16xf32>
    %40 = arith.addf %37, %39 : vector<8x16xf32>
    %c0_25 = arith.constant 0 : index
    %c0_26 = arith.constant 0 : index
    %c0_27 = arith.constant 0 : index
    %41 = vector.load %arg20[%c0_25, %c0_26, %c0_27] : memref<2x8x16xf32, #tpu.memory_space<vmem>>, vector<1x8x16xf32>
    %42 = vector.shape_cast %41 : vector<1x8x16xf32> to vector<8x16xf32>
    %43 = vector.shape_cast %40 : vector<8x16xf32> to vector<1x8x16xf32>
    tpu.vector_store %arg20[%c0_25, %c0_26, %c0_27], %43 {strides = array<i32>} : memref<2x8x16xf32, #tpu.memory_space<vmem>>, vector<1x8x16xf32>,
    %c0_28 = arith.constant 0 : index
    %c0_29 = arith.constant 0 : index
    %c0_30 = arith.constant 0 : index
    %44 = vector.load %arg18[%c0_28, %c0_29, %c0_30] : memref<2x8x1xf32, #tpu.memory_space<vmem>>, vector<1x8x1xf32>
    %45 = vector.shape_cast %44 : vector<1x8x1xf32> to vector<8x1xf32>
    %46 = vector.shape_cast %19 : vector<8x1xf32> to vector<1x8x1xf32>
    tpu.vector_store %arg18[%c0_28, %c0_29, %c0_30], %46 {strides = array<i32>} : memref<2x8x1xf32, #tpu.memory_space<vmem>>, vector<1x8x1xf32>,
    %47 = vector.extract_strided_slice %4 {offsets = [0, 16], sizes = [8, 16], strides = [1, 1]} : vector<8x32xbf16> to vector<8x16xbf16>
    %48 = vector.extract_strided_slice %6 {offsets = [0, 16], sizes = [8, 16], strides = [1, 1]} : vector<8x32xbf16> to vector<8x16xbf16>
    %49 = vector.extract_strided_slice %8 {offsets = [0, 16], sizes = [8, 16], strides = [1, 1]} : vector<8x32xbf16> to vector<8x16xbf16>
    %cst_31 = arith.constant dense<0.000000e+00> : vector<8x8xf32>
    %50 = tpu.matmul %47, %48, %cst_31 {dimension_numbers = #tpu.dot_dimension_numbers<[1], [1], [0], [0], [0, 0, 1, 0], [], []>} : vector<8x16xbf16>, vector<8x16xbf16>, vector<8x8xf32> -> vector<8x8xf32>
    %cst_32 = arith.constant 2.500000e-01 : f32
    %51 = vector.broadcast %cst_32 : f32 to vector<8x8xf32>
    %52 = arith.mulf %50, %51 : vector<8x8xf32>
    %c1 = arith.constant 1 : index
    %c0_33 = arith.constant 0 : index
    %c0_34 = arith.constant 0 : index
    %53 = vector.load %arg18[%c1, %c0_33, %c0_34] : memref<2x8x1xf32, #tpu.memory_space<vmem>>, vector<1x8x1xf32>
    %54 = vector.shape_cast %53 : vector<1x8x1xf32> to vector<8x1xf32>
    %cst_35 = arith.constant dense<0xFF800000> : vector<8xf32>
    %55 = vector.multi_reduction <maximumf>, %52, %cst_35 [1] : vector<8x8xf32> to vector<8xf32>
    %56 = vector.shape_cast %55 : vector<8xf32> to vector<8x1xf32>
    %57 = arith.maximumf %54, %56 : vector<8x1xf32>
    %58 = arith.subf %54, %57 : vector<8x1xf32>
    %59 = math.exp %58 : vector<8x1xf32>
    %60 = vector.broadcast %57 : vector<8x1xf32> to vector<8x8xf32>
    %61 = arith.subf %52, %60 : vector<8x8xf32>
    %62 = math.exp %61 : vector<8x8xf32>
    %c1_36 = arith.constant 1 : index
    %c0_37 = arith.constant 0 : index
    %c0_38 = arith.constant 0 : index
    %63 = vector.load %arg19[%c1_36, %c0_37, %c0_38] : memref<2x8x1xf32, #tpu.memory_space<vmem>>, vector<1x8x1xf32>
    %64 = vector.shape_cast %63 : vector<1x8x1xf32> to vector<8x1xf32>
    %65 = arith.mulf %59, %64 : vector<8x1xf32>
    %cst_39 = arith.constant dense<0.000000e+00> : vector<8xf32>
    %66 = vector.multi_reduction <add>, %62, %cst_39 [1] : vector<8x8xf32> to vector<8xf32>
    %67 = vector.shape_cast %66 : vector<8xf32> to vector<8x1xf32>
    %68 = arith.addf %65, %67 : vector<8x1xf32>
    %c1_40 = arith.constant 1 : index
    %c0_41 = arith.constant 0 : index
    %c0_42 = arith.constant 0 : index
    %69 = vector.load %arg19[%c1_40, %c0_41, %c0_42] : memref<2x8x1xf32, #tpu.memory_space<vmem>>, vector<1x8x1xf32>
    %70 = vector.shape_cast %69 : vector<1x8x1xf32> to vector<8x1xf32>
    %71 = vector.shape_cast %68 : vector<8x1xf32> to vector<1x8x1xf32>
    tpu.vector_store %arg19[%c1_40, %c0_41, %c0_42], %71 {strides = array<i32>} : memref<2x8x1xf32, #tpu.memory_space<vmem>>, vector<1x8x1xf32>,
    %c1_43 = arith.constant 1 : index
    %c0_44 = arith.constant 0 : index
    %c0_45 = arith.constant 0 : index
    %72 = vector.load %arg20[%c1_43, %c0_44, %c0_45] : memref<2x8x16xf32, #tpu.memory_space<vmem>>, vector<1x8x16xf32>
    %73 = vector.shape_cast %72 : vector<1x8x16xf32> to vector<8x16xf32>
    %74 = vector.broadcast %59 : vector<8x1xf32> to vector<8x16xf32>
    %75 = arith.mulf %74, %73 : vector<8x16xf32>
    %76 = arith.truncf %62 : vector<8x8xf32> to vector<8x8xbf16>
    %cst_46 = arith.constant dense<0.000000e+00> : vector<8x16xf32>
    %77 = tpu.matmul %76, %49, %cst_46 {dimension_numbers = #tpu.dot_dimension_numbers<[1], [0], [0], [1], [0, 0, 1, 1], [], []>} : vector<8x8xbf16>, vector<8x16xbf16>, vector<8x16xf32> -> vector<8x16xf32>
    %78 = arith.addf %75, %77 : vector<8x16xf32>
    %c1_47 = arith.constant 1 : index
    %c0_48 = arith.constant 0 : index
    %c0_49 = arith.constant 0 : index
    %79 = vector.load %arg20[%c1_47, %c0_48, %c0_49] : memref<2x8x16xf32, #tpu.memory_space<vmem>>, vector<1x8x16xf32>
    %80 = vector.shape_cast %79 : vector<1x8x16xf32> to vector<8x16xf32>
    %81 = vector.shape_cast %78 : vector<8x16xf32> to vector<1x8x16xf32>
    tpu.vector_store %arg20[%c1_47, %c0_48, %c0_49], %81 {strides = array<i32>} : memref<2x8x16xf32, #tpu.memory_space<vmem>>, vector<1x8x16xf32>,
    %c1_50 = arith.constant 1 : index
    %c0_51 = arith.constant 0 : index
    %c0_52 = arith.constant 0 : index
    %82 = vector.load %arg18[%c1_50, %c0_51, %c0_52] : memref<2x8x1xf32, #tpu.memory_space<vmem>>, vector<1x8x1xf32>
    %83 = vector.shape_cast %82 : vector<1x8x1xf32> to vector<8x1xf32>
    %84 = vector.shape_cast %57 : vector<8x1xf32> to vector<1x8x1xf32>
    tpu.vector_store %arg18[%c1_50, %c0_51, %c0_52], %84 {strides = array<i32>} : memref<2x8x1xf32, #tpu.memory_space<vmem>>, vector<1x8x1xf32>,
    %c0_i32_53 = arith.constant 0 : i32
    %85 = arith.cmpi eq, %arg2, %c0_i32_53 : i32
    %86 = arith.extui %85 : i1 to i32
    %c0_i32_54 = arith.constant 0 : i32
    %87 = arith.cmpi ne, %86, %c0_i32_54 : i32
    scf.if %87 {
      %c0_55 = arith.constant 0 : index
      %c0_56 = arith.constant 0 : index
      %88 = vector.load %arg8[%c0_55, %c0_56] : memref<1x32xf32, #tpu.memory_space<vmem>>, vector<1x32xf32>
      %c0_57 = arith.constant 0 : index
      %c0_58 = arith.constant 0 : index
      %c0_59 = arith.constant 0 : index
      %89 = vector.load %arg20[%c0_57, %c0_58, %c0_59] : memref<2x8x16xf32, #tpu.memory_space<vmem>>, vector<1x8x16xf32>
      %90 = vector.shape_cast %89 : vector<1x8x16xf32> to vector<8x16xf32>
      %c0_60 = arith.constant 0 : index
      %c0_61 = arith.constant 0 : index
      %c0_62 = arith.constant 0 : index
      %91 = vector.load %arg19[%c0_60, %c0_61, %c0_62] : memref<2x8x1xf32, #tpu.memory_space<vmem>>, vector<1x8x1xf32>
      %92 = vector.shape_cast %91 : vector<1x8x1xf32> to vector<8x1xf32>
      %93 = tpu.reciprocal %92 {approx = true} : vector<8x1xf32> -> vector<8x1xf32>
      %94 = vector.broadcast %93 : vector<8x1xf32> to vector<8x16xf32>
      %95 = arith.mulf %90, %94 : vector<8x16xf32>
      %96 = arith.truncf %95 : vector<8x16xf32> to vector<8x16xbf16>
      %c0_63 = arith.constant 0 : index
      %c0_64 = arith.constant 0 : index
      %97 = vector.load %arg7[%c0_63, %c0_64] : memref<32x32xbf16, #tpu.memory_space<vmem>>, vector<16x32xbf16>
      %cst_65 = arith.constant dense<0.000000e+00> : vector<8x32xf32>
      %98 = tpu.matmul %96, %97, %cst_65 {dimension_numbers = #tpu.dot_dimension_numbers<[1], [0], [0], [1], [0, 0, 1, 1], [], []>} : vector<8x16xbf16>, vector<16x32xbf16>, vector<8x32xf32> -> vector<8x32xf32>
      %99 = vector.broadcast %88 : vector<1x32xf32> to vector<8x32xf32>
      %100 = arith.addf %99, %98 : vector<8x32xf32>
      %c1_66 = arith.constant 1 : index
      %c0_67 = arith.constant 0 : index
      %c0_68 = arith.constant 0 : index
      %101 = vector.load %arg20[%c1_66, %c0_67, %c0_68] : memref<2x8x16xf32, #tpu.memory_space<vmem>>, vector<1x8x16xf32>
      %102 = vector.shape_cast %101 : vector<1x8x16xf32> to vector<8x16xf32>
      %c1_69 = arith.constant 1 : index
      %c0_70 = arith.constant 0 : index
      %c0_71 = arith.constant 0 : index
      %103 = vector.load %arg19[%c1_69, %c0_70, %c0_71] : memref<2x8x1xf32, #tpu.memory_space<vmem>>, vector<1x8x1xf32>
      %104 = vector.shape_cast %103 : vector<1x8x1xf32> to vector<8x1xf32>
      %105 = tpu.reciprocal %104 {approx = true} : vector<8x1xf32> -> vector<8x1xf32>
      %106 = vector.broadcast %105 : vector<8x1xf32> to vector<8x16xf32>
      %107 = arith.mulf %102, %106 : vector<8x16xf32>
      %108 = arith.truncf %107 : vector<8x16xf32> to vector<8x16xbf16>
      %c16 = arith.constant 16 : index
      %c0_72 = arith.constant 0 : index
      %109 = vector.load %arg7[%c16, %c0_72] : memref<32x32xbf16, #tpu.memory_space<vmem>>, vector<16x32xbf16>
      %cst_73 = arith.constant dense<0.000000e+00> : vector<8x32xf32>
      %110 = tpu.matmul %108, %109, %cst_73 {dimension_numbers = #tpu.dot_dimension_numbers<[1], [0], [0], [1], [0, 0, 1, 1], [], []>} : vector<8x16xbf16>, vector<16x32xbf16>, vector<8x32xf32> -> vector<8x32xf32>
      %111 = arith.addf %100, %110 : vector<8x32xf32>
      %c0_74 = arith.constant 0 : index
      %c0_75 = arith.constant 0 : index
      %112 = vector.load %arg9[%c0_74, %c0_75] : memref<1x32xf32, #tpu.memory_space<vmem>>, vector<1x32xf32>
      %c0_76 = arith.constant 0 : index
      %c0_77 = arith.constant 0 : index
      %113 = vector.load %arg10[%c0_76, %c0_77] : memref<1x32xf32, #tpu.memory_space<vmem>>, vector<1x32xf32>
      %cst_78 = arith.constant dense<0.000000e+00> : vector<8xf32>
      %114 = vector.multi_reduction <add>, %111, %cst_78 [1] : vector<8x32xf32> to vector<8xf32>
      %115 = vector.shape_cast %114 : vector<8xf32> to vector<8x1xf32>
      %cst_79 = arith.constant 3.200000e+01 : f32
      %116 = vector.broadcast %cst_79 : f32 to vector<8x1xf32>
      %117 = arith.divf %115, %116 : vector<8x1xf32>
      %118 = vector.broadcast %117 : vector<8x1xf32> to vector<8x32xf32>
      %119 = arith.subf %111, %118 : vector<8x32xf32>
      %120 = arith.mulf %119, %119 : vector<8x32xf32>
      %cst_80 = arith.constant dense<0.000000e+00> : vector<8xf32>
      %121 = vector.multi_reduction <add>, %120, %cst_80 [1] : vector<8x32xf32> to vector<8xf32>
      %122 = vector.shape_cast %121 : vector<8xf32> to vector<8x1xf32>
      %cst_81 = arith.constant 3.200000e+01 : f32
      %123 = vector.broadcast %cst_81 : f32 to vector<8x1xf32>
      %124 = arith.divf %122, %123 : vector<8x1xf32>
      %125 = vector.broadcast %117 : vector<8x1xf32> to vector<8x32xf32>
      %126 = arith.subf %111, %125 : vector<8x32xf32>
      %cst_82 = arith.constant 9.99999974E-6 : f32
      %127 = vector.broadcast %cst_82 : f32 to vector<8x1xf32>
      %128 = arith.addf %124, %127 : vector<8x1xf32>
      %129 = math.rsqrt %128 : vector<8x1xf32>
      %130 = vector.broadcast %129 : vector<8x1xf32> to vector<8x32xf32>
      %131 = arith.mulf %126, %130 : vector<8x32xf32>
      %132 = vector.broadcast %112 : vector<1x32xf32> to vector<8x32xf32>
      %133 = arith.mulf %131, %132 : vector<8x32xf32>
      %134 = vector.broadcast %113 : vector<1x32xf32> to vector<8x32xf32>
      %135 = arith.addf %133, %134 : vector<8x32xf32>
      %c0_83 = arith.constant 0 : index
      %c0_84 = arith.constant 0 : index
      %c0_85 = arith.constant 0 : index
      %136 = vector.load %arg6[%c0_83, %c0_84, %c0_85] : memref<1x8x32xf32, #tpu.memory_space<vmem>>, vector<1x8x32xf32>
      %137 = vector.shape_cast %136 : vector<1x8x32xf32> to vector<8x32xf32>
      %138 = arith.addf %137, %135 : vector<8x32xf32>
      %c0_86 = arith.constant 0 : index
      %c0_87 = arith.constant 0 : index
      %139 = vector.load %arg11[%c0_86, %c0_87] : memref<1x32xf32, #tpu.memory_space<vmem>>, vector<1x32xf32>
      %c0_88 = arith.constant 0 : index
      %c0_89 = arith.constant 0 : index
      %140 = vector.load %arg12[%c0_88, %c0_89] : memref<1x32xf32, #tpu.memory_space<vmem>>, vector<1x32xf32>
      %cst_90 = arith.constant dense<0.000000e+00> : vector<8xf32>
      %141 = vector.multi_reduction <add>, %138, %cst_90 [1] : vector<8x32xf32> to vector<8xf32>
      %142 = vector.shape_cast %141 : vector<8xf32> to vector<8x1xf32>
      %cst_91 = arith.constant 3.200000e+01 : f32
      %143 = vector.broadcast %cst_91 : f32 to vector<8x1xf32>
      %144 = arith.divf %142, %143 : vector<8x1xf32>
      %145 = vector.broadcast %144 : vector<8x1xf32> to vector<8x32xf32>
      %146 = arith.subf %138, %145 : vector<8x32xf32>
      %147 = arith.mulf %146, %146 : vector<8x32xf32>
      %cst_92 = arith.constant dense<0.000000e+00> : vector<8xf32>
      %148 = vector.multi_reduction <add>, %147, %cst_92 [1] : vector<8x32xf32> to vector<8xf32>
      %149 = vector.shape_cast %148 : vector<8xf32> to vector<8x1xf32>
      %cst_93 = arith.constant 3.200000e+01 : f32
      %150 = vector.broadcast %cst_93 : f32 to vector<8x1xf32>
      %151 = arith.divf %149, %150 : vector<8x1xf32>
      %152 = vector.broadcast %144 : vector<8x1xf32> to vector<8x32xf32>
      %153 = arith.subf %138, %152 : vector<8x32xf32>
      %cst_94 = arith.constant 9.99999974E-6 : f32
      %154 = vector.broadcast %cst_94 : f32 to vector<8x1xf32>
      %155 = arith.addf %151, %154 : vector<8x1xf32>
      %156 = math.rsqrt %155 : vector<8x1xf32>
      %157 = vector.broadcast %156 : vector<8x1xf32> to vector<8x32xf32>
      %158 = arith.mulf %153, %157 : vector<8x32xf32>
      %159 = vector.broadcast %139 : vector<1x32xf32> to vector<8x32xf32>
      %160 = arith.mulf %158, %159 : vector<8x32xf32>
      %161 = vector.broadcast %140 : vector<1x32xf32> to vector<8x32xf32>
      %162 = arith.addf %160, %161 : vector<8x32xf32>
      %163 = arith.truncf %162 : vector<8x32xf32> to vector<8x32xbf16>
      %c0_95 = arith.constant 0 : index
      %c0_96 = arith.constant 0 : index
      %164 = vector.load %arg13[%c0_95, %c0_96] : memref<32x32xbf16, #tpu.memory_space<vmem>>, vector<32x32xbf16>
      %cst_97 = arith.constant dense<0.000000e+00> : vector<8x32xf32>
      %165 = tpu.matmul %163, %164, %cst_97 {dimension_numbers = #tpu.dot_dimension_numbers<[1], [0], [0], [1], [0, 0, 1, 1], [], []>} : vector<8x32xbf16>, vector<32x32xbf16>, vector<8x32xf32> -> vector<8x32xf32>
      %c0_98 = arith.constant 0 : index
      %c0_99 = arith.constant 0 : index
      %166 = vector.load %arg14[%c0_98, %c0_99] : memref<1x32xf32, #tpu.memory_space<vmem>>, vector<1x32xf32>
      %167 = vector.broadcast %166 : vector<1x32xf32> to vector<8x32xf32>
      %168 = arith.addf %165, %167 : vector<8x32xf32>
      %cst_100 = arith.constant 0.000000e+00 : f32
      %169 = vector.broadcast %cst_100 : f32 to vector<8x32xf32>
      %170 = arith.maximumf %168, %169 : vector<8x32xf32>
      %171 = arith.truncf %170 : vector<8x32xf32> to vector<8x32xbf16>
      %c0_101 = arith.constant 0 : index
      %c0_102 = arith.constant 0 : index
      %172 = vector.load %arg15[%c0_101, %c0_102] : memref<32x32xbf16, #tpu.memory_space<vmem>>, vector<32x32xbf16>
      %cst_103 = arith.constant dense<0.000000e+00> : vector<8x32xf32>
      %173 = tpu.matmul %171, %172, %cst_103 {dimension_numbers = #tpu.dot_dimension_numbers<[1], [0], [0], [1], [0, 0, 1, 1], [], []>} : vector<8x32xbf16>, vector<32x32xbf16>, vector<8x32xf32> -> vector<8x32xf32>
      %c0_104 = arith.constant 0 : index
      %c0_105 = arith.constant 0 : index
      %174 = vector.load %arg16[%c0_104, %c0_105] : memref<1x32xf32, #tpu.memory_space<vmem>>, vector<1x32xf32>
      %175 = vector.broadcast %174 : vector<1x32xf32> to vector<8x32xf32>
      %176 = arith.addf %173, %175 : vector<8x32xf32>
      %177 = arith.addf %138, %176 : vector<8x32xf32>
      %c0_106 = arith.constant 0 : index
      %c0_107 = arith.constant 0 : index
      %c0_108 = arith.constant 0 : index
      %178 = vector.load %arg17[%c0_106, %c0_107, %c0_108] : memref<1x8x32xf32, #tpu.memory_space<vmem>>, vector<1x8x32xf32>
      %179 = vector.shape_cast %178 : vector<1x8x32xf32> to vector<8x32xf32>
      %180 = vector.shape_cast %177 : vector<8x32xf32> to vector<1x8x32xf32>
      tpu.vector_store %arg17[%c0_106, %c0_107, %c0_108], %180 {strides = array<i32>} : memref<1x8x32xf32, #tpu.memory_space<vmem>>, vector<1x8x32xf32>,
    } else {
    }
    return
  }
  func.func @transform_0(%arg0: i32, %arg1: i32, %arg2: i32) -> (i32, i32, i32) {
    %c0_i32 = arith.constant 0 : i32
    %c0_i32_0 = arith.constant 0 : i32
    return %arg0, %arg1, %c0_i32 : i32, i32, i32
  }
  func.func @transform_1(%arg0: i32, %arg1: i32, %arg2: i32) -> (i32, i32, i32) {
    %c0_i32 = arith.constant 0 : i32
    %c0_i32_0 = arith.constant 0 : i32
    return %arg0, %arg2, %c0_i32 : i32, i32, i32
  }
  func.func @transform_2(%arg0: i32, %arg1: i32, %arg2: i32) -> (i32, i32, i32) {
    %c0_i32 = arith.constant 0 : i32
    %c0_i32_0 = arith.constant 0 : i32
    return %arg0, %arg2, %c0_i32 : i32, i32, i32
  }
  func.func @transform_3(%arg0: i32, %arg1: i32, %arg2: i32) -> (i32, i32, i32) {
    %c0_i32 = arith.constant 0 : i32
    %c0_i32_0 = arith.constant 0 : i32
    return %arg0, %arg1, %c0_i32 : i32, i32, i32
  }
  func.func @transform_4(%arg0: i32, %arg1: i32, %arg2: i32) -> (i32, i32) {
    %c0_i32 = arith.constant 0 : i32
    %c0_i32_0 = arith.constant 0 : i32
    %c0_i32_1 = arith.constant 0 : i32
    return %c0_i32, %c0_i32_0 : i32, i32
  }
  func.func @transform_5(%arg0: i32, %arg1: i32, %arg2: i32) -> (i32, i32) {
    %c0_i32 = arith.constant 0 : i32
    %c0_i32_0 = arith.constant 0 : i32
    %c0_i32_1 = arith.constant 0 : i32
    return %c0_i32, %c0_i32_0 : i32, i32
  }
  func.func @transform_6(%arg0: i32, %arg1: i32, %arg2: i32) -> (i32, i32) {
    %c0_i32 = arith.constant 0 : i32
    %c0_i32_0 = arith.constant 0 : i32
    %c0_i32_1 = arith.constant 0 : i32
    return %c0_i32, %c0_i32_0 : i32, i32
  }
  func.func @transform_7(%arg0: i32, %arg1: i32, %arg2: i32) -> (i32, i32) {
    %c0_i32 = arith.constant 0 : i32
    %c0_i32_0 = arith.constant 0 : i32
    %c0_i32_1 = arith.constant 0 : i32
    return %c0_i32, %c0_i32_0 : i32, i32
  }
  func.func @transform_8(%arg0: i32, %arg1: i32, %arg2: i32) -> (i32, i32) {
    %c0_i32 = arith.constant 0 : i32
    %c0_i32_0 = arith.constant 0 : i32
    %c0_i32_1 = arith.constant 0 : i32
    return %c0_i32, %c0_i32_0 : i32, i32
  }
  func.func @transform_9(%arg0: i32, %arg1: i32, %arg2: i32) -> (i32, i32) {
    %c0_i32 = arith.constant 0 : i32
    %c0_i32_0 = arith.constant 0 : i32
    %c0_i32_1 = arith.constant 0 : i32
    return %c0_i32, %c0_i32_0 : i32, i32
  }
  func.func @transform_10(%arg0: i32, %arg1: i32, %arg2: i32) -> (i32, i32) {
    %c0_i32 = arith.constant 0 : i32
    %c0_i32_0 = arith.constant 0 : i32
    %c0_i32_1 = arith.constant 0 : i32
    return %c0_i32, %c0_i32_0 : i32, i32
  }
  func.func @transform_11(%arg0: i32, %arg1: i32, %arg2: i32) -> (i32, i32) {
    %c0_i32 = arith.constant 0 : i32
    %c0_i32_0 = arith.constant 0 : i32
    %c0_i32_1 = arith.constant 0 : i32
    return %c0_i32, %c0_i32_0 : i32, i32
  }
  func.func @transform_12(%arg0: i32, %arg1: i32, %arg2: i32) -> (i32, i32) {
    %c0_i32 = arith.constant 0 : i32
    %c0_i32_0 = arith.constant 0 : i32
    %c0_i32_1 = arith.constant 0 : i32
    return %c0_i32, %c0_i32_0 : i32, i32
  }
  func.func @transform_13(%arg0: i32, %arg1: i32, %arg2: i32) -> (i32, i32) {
    %c0_i32 = arith.constant 0 : i32
    %c0_i32_0 = arith.constant 0 : i32
    %c0_i32_1 = arith.constant 0 : i32
    return %c0_i32, %c0_i32_0 : i32, i32
  }
  func.func @transform_14(%arg0: i32, %arg1: i32, %arg2: i32) -> (i32, i32, i32) {
    %c0_i32 = arith.constant 0 : i32
    %c0_i32_0 = arith.constant 0 : i32
    return %arg0, %arg1, %c0_i32 : i32, i32, i32
  }
}

module attributes {stable_mosaic.version = 11 : i64} {
  func.func @_ln_qkv_kernel(%arg0: i32, %arg1: memref<16x32xf32, #tpu.memory_space<vmem>>, %arg2: memref<1x32xf32, #tpu.memory_space<vmem>>, %arg3: memref<1x32xf32, #tpu.memory_space<vmem>>, %arg4: memref<32x96xbf16, #tpu.memory_space<vmem>>, %arg5: memref<1x96xf32, #tpu.memory_space<vmem>>, %arg6: memref<16x32xbf16, #tpu.memory_space<vmem>>, %arg7: memref<16x32xbf16, #tpu.memory_space<vmem>>, %arg8: memref<16x32xbf16, #tpu.memory_space<vmem>>) attributes {dimension_semantics = [#tpu.dimension_semantics<parallel>], iteration_bounds = array<i64: 1>, scalar_prefetch = 0 : i64, scratch_operands = 0 : i64, tpu.core_type = #tpu.core_type<tc>, window_params = [{transform_indices = @transform_0, window_bounds = array<i64: 16, 32>}, {pipeline_mode = #tpu.pipeline_mode<synchronous>, transform_indices = @transform_1, window_bounds = array<i64: 1, 32>}, {pipeline_mode = #tpu.pipeline_mode<synchronous>, transform_indices = @transform_2, window_bounds = array<i64: 1, 32>}, {pipeline_mode = #tpu.pipeline_mode<synchronous>, transform_indices = @transform_3, window_bounds = array<i64: 32, 96>}, {pipeline_mode = #tpu.pipeline_mode<synchronous>, transform_indices = @transform_4, window_bounds = array<i64: 1, 96>}, {transform_indices = @transform_5, window_bounds = array<i64: 16, 32>}, {transform_indices = @transform_6, window_bounds = array<i64: 16, 32>}, {transform_indices = @transform_7, window_bounds = array<i64: 16, 32>}]} {
    %c0 = arith.constant 0 : index
    %c0_0 = arith.constant 0 : index
    %0 = vector.load %arg1[%c0, %c0_0] : memref<16x32xf32, #tpu.memory_space<vmem>>, vector<16x32xf32>
    %c0_1 = arith.constant 0 : index
    %c0_2 = arith.constant 0 : index
    %1 = vector.load %arg2[%c0_1, %c0_2] : memref<1x32xf32, #tpu.memory_space<vmem>>, vector<1x32xf32>
    %c0_3 = arith.constant 0 : index
    %c0_4 = arith.constant 0 : index
    %2 = vector.load %arg3[%c0_3, %c0_4] : memref<1x32xf32, #tpu.memory_space<vmem>>, vector<1x32xf32>
    %cst = arith.constant dense<0.000000e+00> : vector<16xf32>
    %3 = vector.multi_reduction <add>, %0, %cst [1] : vector<16x32xf32> to vector<16xf32>
    %4 = vector.shape_cast %3 : vector<16xf32> to vector<16x1xf32>
    %cst_5 = arith.constant 3.200000e+01 : f32
    %5 = vector.broadcast %cst_5 : f32 to vector<16x1xf32>
    %6 = arith.divf %4, %5 : vector<16x1xf32>
    %7 = vector.broadcast %6 : vector<16x1xf32> to vector<16x32xf32>
    %8 = arith.subf %0, %7 : vector<16x32xf32>
    %9 = arith.mulf %8, %8 : vector<16x32xf32>
    %cst_6 = arith.constant dense<0.000000e+00> : vector<16xf32>
    %10 = vector.multi_reduction <add>, %9, %cst_6 [1] : vector<16x32xf32> to vector<16xf32>
    %11 = vector.shape_cast %10 : vector<16xf32> to vector<16x1xf32>
    %cst_7 = arith.constant 3.200000e+01 : f32
    %12 = vector.broadcast %cst_7 : f32 to vector<16x1xf32>
    %13 = arith.divf %11, %12 : vector<16x1xf32>
    %14 = vector.broadcast %6 : vector<16x1xf32> to vector<16x32xf32>
    %15 = arith.subf %0, %14 : vector<16x32xf32>
    %cst_8 = arith.constant 9.99999974E-6 : f32
    %16 = vector.broadcast %cst_8 : f32 to vector<16x1xf32>
    %17 = arith.addf %13, %16 : vector<16x1xf32>
    %18 = math.rsqrt %17 : vector<16x1xf32>
    %19 = vector.broadcast %18 : vector<16x1xf32> to vector<16x32xf32>
    %20 = arith.mulf %15, %19 : vector<16x32xf32>
    %21 = vector.broadcast %1 : vector<1x32xf32> to vector<16x32xf32>
    %22 = arith.mulf %20, %21 : vector<16x32xf32>
    %23 = vector.broadcast %2 : vector<1x32xf32> to vector<16x32xf32>
    %24 = arith.addf %22, %23 : vector<16x32xf32>
    %25 = arith.truncf %24 : vector<16x32xf32> to vector<16x32xbf16>
    %c0_9 = arith.constant 0 : index
    %c0_10 = arith.constant 0 : index
    %26 = vector.load %arg4[%c0_9, %c0_10] : memref<32x96xbf16, #tpu.memory_space<vmem>>, vector<32x96xbf16>
    %cst_11 = arith.constant dense<0.000000e+00> : vector<16x96xf32>
    %27 = tpu.matmul %25, %26, %cst_11 {dimension_numbers = #tpu.dot_dimension_numbers<[1], [0], [0], [1], [0, 0, 1, 1], [], []>} : vector<16x32xbf16>, vector<32x96xbf16>, vector<16x96xf32> -> vector<16x96xf32>
    %c0_12 = arith.constant 0 : index
    %c0_13 = arith.constant 0 : index
    %28 = vector.load %arg5[%c0_12, %c0_13] : memref<1x96xf32, #tpu.memory_space<vmem>>, vector<1x96xf32>
    %29 = vector.broadcast %28 : vector<1x96xf32> to vector<16x96xf32>
    %30 = arith.addf %27, %29 : vector<16x96xf32>
    %31 = vector.extract_strided_slice %30 {offsets = [0, 0], sizes = [16, 32], strides = [1, 1]} : vector<16x96xf32> to vector<16x32xf32>
    %32 = arith.truncf %31 : vector<16x32xf32> to vector<16x32xbf16>
    %c0_14 = arith.constant 0 : index
    %c0_15 = arith.constant 0 : index
    %33 = vector.load %arg6[%c0_14, %c0_15] : memref<16x32xbf16, #tpu.memory_space<vmem>>, vector<16x32xbf16>
    tpu.vector_store %arg6[%c0_14, %c0_15], %32 {strides = array<i32>} : memref<16x32xbf16, #tpu.memory_space<vmem>>, vector<16x32xbf16>,
    %34 = vector.extract_strided_slice %30 {offsets = [0, 32], sizes = [16, 32], strides = [1, 1]} : vector<16x96xf32> to vector<16x32xf32>
    %35 = arith.truncf %34 : vector<16x32xf32> to vector<16x32xbf16>
    %c0_16 = arith.constant 0 : index
    %c0_17 = arith.constant 0 : index
    %36 = vector.load %arg7[%c0_16, %c0_17] : memref<16x32xbf16, #tpu.memory_space<vmem>>, vector<16x32xbf16>
    tpu.vector_store %arg7[%c0_16, %c0_17], %35 {strides = array<i32>} : memref<16x32xbf16, #tpu.memory_space<vmem>>, vector<16x32xbf16>,
    %37 = vector.extract_strided_slice %30 {offsets = [0, 64], sizes = [16, 32], strides = [1, 1]} : vector<16x96xf32> to vector<16x32xf32>
    %38 = arith.truncf %37 : vector<16x32xf32> to vector<16x32xbf16>
    %c0_18 = arith.constant 0 : index
    %c0_19 = arith.constant 0 : index
    %39 = vector.load %arg8[%c0_18, %c0_19] : memref<16x32xbf16, #tpu.memory_space<vmem>>, vector<16x32xbf16>
    tpu.vector_store %arg8[%c0_18, %c0_19], %38 {strides = array<i32>} : memref<16x32xbf16, #tpu.memory_space<vmem>>, vector<16x32xbf16>,
    return
  }
  func.func @transform_0(%arg0: i32) -> (i32, i32) {
    %c0_i32 = arith.constant 0 : i32
    %c0_i32_0 = arith.constant 0 : i32
    return %arg0, %c0_i32 : i32, i32
  }
  func.func @transform_1(%arg0: i32) -> (i32, i32) {
    %c0_i32 = arith.constant 0 : i32
    %c0_i32_0 = arith.constant 0 : i32
    %c0_i32_1 = arith.constant 0 : i32
    return %c0_i32, %c0_i32_0 : i32, i32
  }
  func.func @transform_2(%arg0: i32) -> (i32, i32) {
    %c0_i32 = arith.constant 0 : i32
    %c0_i32_0 = arith.constant 0 : i32
    %c0_i32_1 = arith.constant 0 : i32
    return %c0_i32, %c0_i32_0 : i32, i32
  }
  func.func @transform_3(%arg0: i32) -> (i32, i32) {
    %c0_i32 = arith.constant 0 : i32
    %c0_i32_0 = arith.constant 0 : i32
    %c0_i32_1 = arith.constant 0 : i32
    return %c0_i32, %c0_i32_0 : i32, i32
  }
  func.func @transform_4(%arg0: i32) -> (i32, i32) {
    %c0_i32 = arith.constant 0 : i32
    %c0_i32_0 = arith.constant 0 : i32
    %c0_i32_1 = arith.constant 0 : i32
    return %c0_i32, %c0_i32_0 : i32, i32
  }
  func.func @transform_5(%arg0: i32) -> (i32, i32) {
    %c0_i32 = arith.constant 0 : i32
    %c0_i32_0 = arith.constant 0 : i32
    return %arg0, %c0_i32 : i32, i32
  }
  func.func @transform_6(%arg0: i32) -> (i32, i32) {
    %c0_i32 = arith.constant 0 : i32
    %c0_i32_0 = arith.constant 0 : i32
    return %arg0, %c0_i32 : i32, i32
  }
  func.func @transform_7(%arg0: i32) -> (i32, i32) {
    %c0_i32 = arith.constant 0 : i32
    %c0_i32_0 = arith.constant 0 : i32
    return %arg0, %c0_i32 : i32, i32
  }
}

module attributes {stable_mosaic.version = 11 : i64} {
  func.func @_ln_mlp_kernel(%arg0: i32, %arg1: memref<16x32xf32, #tpu.memory_space<vmem>>, %arg2: memref<1x32xf32, #tpu.memory_space<vmem>>, %arg3: memref<1x32xf32, #tpu.memory_space<vmem>>, %arg4: memref<32x32xbf16, #tpu.memory_space<vmem>>, %arg5: memref<1x32xf32, #tpu.memory_space<vmem>>, %arg6: memref<32x128xbf16, #tpu.memory_space<vmem>>, %arg7: memref<1x128xf32, #tpu.memory_space<vmem>>, %arg8: memref<16x128xf32, #tpu.memory_space<vmem>>) attributes {dimension_semantics = [#tpu.dimension_semantics<parallel>], iteration_bounds = array<i64: 1>, scalar_prefetch = 0 : i64, scratch_operands = 0 : i64, tpu.core_type = #tpu.core_type<tc>, window_params = [{transform_indices = @transform_0, window_bounds = array<i64: 16, 32>}, {pipeline_mode = #tpu.pipeline_mode<synchronous>, transform_indices = @transform_1, window_bounds = array<i64: 1, 32>}, {pipeline_mode = #tpu.pipeline_mode<synchronous>, transform_indices = @transform_2, window_bounds = array<i64: 1, 32>}, {pipeline_mode = #tpu.pipeline_mode<synchronous>, transform_indices = @transform_3, window_bounds = array<i64: 32, 32>}, {pipeline_mode = #tpu.pipeline_mode<synchronous>, transform_indices = @transform_4, window_bounds = array<i64: 1, 32>}, {pipeline_mode = #tpu.pipeline_mode<synchronous>, transform_indices = @transform_5, window_bounds = array<i64: 32, 128>}, {pipeline_mode = #tpu.pipeline_mode<synchronous>, transform_indices = @transform_6, window_bounds = array<i64: 1, 128>}, {transform_indices = @transform_7, window_bounds = array<i64: 16, 128>}]} {
    %c0 = arith.constant 0 : index
    %c0_0 = arith.constant 0 : index
    %0 = vector.load %arg1[%c0, %c0_0] : memref<16x32xf32, #tpu.memory_space<vmem>>, vector<16x32xf32>
    %c0_1 = arith.constant 0 : index
    %c0_2 = arith.constant 0 : index
    %1 = vector.load %arg2[%c0_1, %c0_2] : memref<1x32xf32, #tpu.memory_space<vmem>>, vector<1x32xf32>
    %c0_3 = arith.constant 0 : index
    %c0_4 = arith.constant 0 : index
    %2 = vector.load %arg3[%c0_3, %c0_4] : memref<1x32xf32, #tpu.memory_space<vmem>>, vector<1x32xf32>
    %cst = arith.constant dense<0.000000e+00> : vector<16xf32>
    %3 = vector.multi_reduction <add>, %0, %cst [1] : vector<16x32xf32> to vector<16xf32>
    %4 = vector.shape_cast %3 : vector<16xf32> to vector<16x1xf32>
    %cst_5 = arith.constant 3.200000e+01 : f32
    %5 = vector.broadcast %cst_5 : f32 to vector<16x1xf32>
    %6 = arith.divf %4, %5 : vector<16x1xf32>
    %7 = vector.broadcast %6 : vector<16x1xf32> to vector<16x32xf32>
    %8 = arith.subf %0, %7 : vector<16x32xf32>
    %9 = arith.mulf %8, %8 : vector<16x32xf32>
    %cst_6 = arith.constant dense<0.000000e+00> : vector<16xf32>
    %10 = vector.multi_reduction <add>, %9, %cst_6 [1] : vector<16x32xf32> to vector<16xf32>
    %11 = vector.shape_cast %10 : vector<16xf32> to vector<16x1xf32>
    %cst_7 = arith.constant 3.200000e+01 : f32
    %12 = vector.broadcast %cst_7 : f32 to vector<16x1xf32>
    %13 = arith.divf %11, %12 : vector<16x1xf32>
    %14 = vector.broadcast %6 : vector<16x1xf32> to vector<16x32xf32>
    %15 = arith.subf %0, %14 : vector<16x32xf32>
    %cst_8 = arith.constant 9.99999974E-6 : f32
    %16 = vector.broadcast %cst_8 : f32 to vector<16x1xf32>
    %17 = arith.addf %13, %16 : vector<16x1xf32>
    %18 = math.rsqrt %17 : vector<16x1xf32>
    %19 = vector.broadcast %18 : vector<16x1xf32> to vector<16x32xf32>
    %20 = arith.mulf %15, %19 : vector<16x32xf32>
    %21 = vector.broadcast %1 : vector<1x32xf32> to vector<16x32xf32>
    %22 = arith.mulf %20, %21 : vector<16x32xf32>
    %23 = vector.broadcast %2 : vector<1x32xf32> to vector<16x32xf32>
    %24 = arith.addf %22, %23 : vector<16x32xf32>
    %25 = arith.truncf %24 : vector<16x32xf32> to vector<16x32xbf16>
    %c0_9 = arith.constant 0 : index
    %c0_10 = arith.constant 0 : index
    %26 = vector.load %arg4[%c0_9, %c0_10] : memref<32x32xbf16, #tpu.memory_space<vmem>>, vector<32x32xbf16>
    %cst_11 = arith.constant dense<0.000000e+00> : vector<16x32xf32>
    %27 = tpu.matmul %25, %26, %cst_11 {dimension_numbers = #tpu.dot_dimension_numbers<[1], [0], [0], [1], [0, 0, 1, 1], [], []>} : vector<16x32xbf16>, vector<32x32xbf16>, vector<16x32xf32> -> vector<16x32xf32>
    %c0_12 = arith.constant 0 : index
    %c0_13 = arith.constant 0 : index
    %28 = vector.load %arg5[%c0_12, %c0_13] : memref<1x32xf32, #tpu.memory_space<vmem>>, vector<1x32xf32>
    %29 = vector.broadcast %28 : vector<1x32xf32> to vector<16x32xf32>
    %30 = arith.addf %27, %29 : vector<16x32xf32>
    %cst_14 = arith.constant 0.000000e+00 : f32
    %31 = vector.broadcast %cst_14 : f32 to vector<16x32xf32>
    %32 = arith.maximumf %30, %31 : vector<16x32xf32>
    %33 = arith.truncf %32 : vector<16x32xf32> to vector<16x32xbf16>
    %c0_15 = arith.constant 0 : index
    %c0_16 = arith.constant 0 : index
    %34 = vector.load %arg6[%c0_15, %c0_16] : memref<32x128xbf16, #tpu.memory_space<vmem>>, vector<32x128xbf16>
    %cst_17 = arith.constant dense<0.000000e+00> : vector<16x128xf32>
    %35 = tpu.matmul %33, %34, %cst_17 {dimension_numbers = #tpu.dot_dimension_numbers<[1], [0], [0], [1], [0, 0, 1, 1], [], []>} : vector<16x32xbf16>, vector<32x128xbf16>, vector<16x128xf32> -> vector<16x128xf32>
    %c0_18 = arith.constant 0 : index
    %c0_19 = arith.constant 0 : index
    %36 = vector.load %arg7[%c0_18, %c0_19] : memref<1x128xf32, #tpu.memory_space<vmem>>, vector<1x128xf32>
    %37 = vector.broadcast %36 : vector<1x128xf32> to vector<16x128xf32>
    %38 = arith.addf %35, %37 : vector<16x128xf32>
    %c0_20 = arith.constant 0 : index
    %c0_21 = arith.constant 0 : index
    %39 = vector.load %arg8[%c0_20, %c0_21] : memref<16x128xf32, #tpu.memory_space<vmem>>, vector<16x128xf32>
    tpu.vector_store %arg8[%c0_20, %c0_21], %38 {strides = array<i32>} : memref<16x128xf32, #tpu.memory_space<vmem>>, vector<16x128xf32>,
    return
  }
  func.func @transform_0(%arg0: i32) -> (i32, i32) {
    %c0_i32 = arith.constant 0 : i32
    %c0_i32_0 = arith.constant 0 : i32
    return %arg0, %c0_i32 : i32, i32
  }
  func.func @transform_1(%arg0: i32) -> (i32, i32) {
    %c0_i32 = arith.constant 0 : i32
    %c0_i32_0 = arith.constant 0 : i32
    %c0_i32_1 = arith.constant 0 : i32
    return %c0_i32, %c0_i32_0 : i32, i32
  }
  func.func @transform_2(%arg0: i32) -> (i32, i32) {
    %c0_i32 = arith.constant 0 : i32
    %c0_i32_0 = arith.constant 0 : i32
    %c0_i32_1 = arith.constant 0 : i32
    return %c0_i32, %c0_i32_0 : i32, i32
  }
  func.func @transform_3(%arg0: i32) -> (i32, i32) {
    %c0_i32 = arith.constant 0 : i32
    %c0_i32_0 = arith.constant 0 : i32
    %c0_i32_1 = arith.constant 0 : i32
    return %c0_i32, %c0_i32_0 : i32, i32
  }
  func.func @transform_4(%arg0: i32) -> (i32, i32) {
    %c0_i32 = arith.constant 0 : i32
    %c0_i32_0 = arith.constant 0 : i32
    %c0_i32_1 = arith.constant 0 : i32
    return %c0_i32, %c0_i32_0 : i32, i32
  }
  func.func @transform_5(%arg0: i32) -> (i32, i32) {
    %c0_i32 = arith.constant 0 : i32
    %c0_i32_0 = arith.constant 0 : i32
    %c0_i32_1 = arith.constant 0 : i32
    return %c0_i32, %c0_i32_0 : i32, i32
  }
  func.func @transform_6(%arg0: i32) -> (i32, i32) {
    %c0_i32 = arith.constant 0 : i32
    %c0_i32_0 = arith.constant 0 : i32
    %c0_i32_1 = arith.constant 0 : i32
    return %c0_i32, %c0_i32_0 : i32, i32
  }
  func.func @transform_7(%arg0: i32) -> (i32, i32) {
    %c0_i32 = arith.constant 0 : i32
    %c0_i32_0 = arith.constant 0 : i32
    return %arg0, %c0_i32 : i32, i32
  }
}

</mosaic_0001>

<llo_original>
// kernel: full_transformer_encoder.6
$region0: #{full_transformer_encoder.6}
  #allocation0 [shape = 'u32[]', space=smem, size = 0x4, offset = 0x4, fixed_abs, tag = 'smem constant byte address 0x4 - core index']
  #allocation1 [shape = 'u32[144,128]{1,0:T(1,128)}', space=vmem, size = 0x12000, scoped, tag = 'internal scratch']
  %s0 = inlined_call_operand.vmem [shape: f32[16,128], index: 0, kind: input, shape index: {}]
  %s1 = inlined_call_operand.vmem [shape: bf16[128,32], index: 1, kind: input, shape index: {}]
  %s2 = inlined_call_operand.vmem [shape: f32[1,32], index: 2, kind: input, shape index: {}]
  %s3 = inlined_call_operand.vmem [shape: bf16[32,32], index: 3, kind: input, shape index: {}]
  %s4 = inlined_call_operand.vmem [shape: f32[1,32], index: 4, kind: input, shape index: {}]
  %s5 = inlined_call_operand.vmem [shape: f32[16,32], index: 5, kind: output, shape index: {}]
  %s6 = sld [smem:[#allocation0]]
  $region30: #{full_transformer_encoder.6} parent=0
    _
  %s8 = ssub.s32 1, %s6
  %s9 = scalar_select 0, %s8, %s6
  // Predicated region
  $region2: #{full_transformer_encoder.6} parent=0 // pred_check
    _
  $region3: #{full_transformer_encoder.6} parent=0 // pred_check_branch
    %11 = sbr.rel (0) target = $region5
  $region4: #{full_transformer_encoder.6} parent=0 // pred_region
    _
  $region5: #{full_transformer_encoder.6} parent=0 // pred_fallthru
    _
  // Predicated region
  $region6: #{full_transformer_encoder.6} parent=0 // pred_check
    _
  $region7: #{full_transformer_encoder.6} parent=0 // pred_check_branch
    %13 = sbr.rel (0) target = $region9
  $region8: #{full_transformer_encoder.6} parent=0 // pred_region
    _
  $region9: #{full_transformer_encoder.6} parent=0 // pred_fallthru
    _
  // Predicated region
  $region10: #{full_transformer_encoder.6} parent=0 // pred_check
    _
  $region11: #{full_transformer_encoder.6} parent=0 // pred_check_branch
    %15 = sbr.rel (0) target = $region13
  $region12: #{full_transformer_encoder.6} parent=0 // pred_region
    _
  $region13: #{full_transformer_encoder.6} parent=0 // pred_fallthru
    _
  // Predicated region
  $region14: #{full_transformer_encoder.6} parent=0 // pred_check
    _
  $region15: #{full_transformer_encoder.6} parent=0 // pred_check_branch
    %17 = sbr.rel (0) target = $region17
  $region16: #{full_transformer_encoder.6} parent=0 // pred_region
    _
  $region17: #{full_transformer_encoder.6} parent=0 // pred_fallthru
    _
  // Predicated region
  $region18: #{full_transformer_encoder.6} parent=0 // pred_check
    _
  $region19: #{full_transformer_encoder.6} parent=0 // pred_check_branch
    %19 = sbr.rel (0) target = $region21
  $region20: #{full_transformer_encoder.6} parent=0 // pred_region
    _
  $region21: #{full_transformer_encoder.6} parent=0 // pred_fallthru
    _
  %v21 = vld [vmem:[%s0] sm:$0xff]
  %v22 = vld [vmem:[%s0 + $0x8] sm:$0xff]
  %v23 = vpack.c.bf16 %v22, %v21
  %v24 = vld [vmem:[%s1] sm:$0xf]
  %v25 = vld [vmem:[%s1 + $0x4] sm:$0xf]
  %v26 = vld [vmem:[%s1 + $0x8] sm:$0xf]
  %v27 = vld [vmem:[%s1 + $0xc] sm:$0xf]
  %v28 = vld [vmem:[%s1 + $0x10] sm:$0xf]
  %v29 = vld [vmem:[%s1 + $0x14] sm:$0xf]
  %v30 = vld [vmem:[%s1 + $0x18] sm:$0xf]
  %v31 = vld [vmem:[%s1 + $0x1c] sm:$0xf]
  %v32 = vld [vmem:[%s1 + $0x20] sm:$0xf]
  %v33 = vld [vmem:[%s1 + $0x24] sm:$0xf]
  %v34 = vld [vmem:[%s1 + $0x28] sm:$0xf]
  %v35 = vld [vmem:[%s1 + $0x2c] sm:$0xf]
  %v36 = vld [vmem:[%s1 + $0x30] sm:$0xf]
  %v37 = vld [vmem:[%s1 + $0x34] sm:$0xf]
  %v38 = vld [vmem:[%s1 + $0x38] sm:$0xf]
  %v39 = vld [vmem:[%s1 + $0x3c] sm:$0xf]
  %v40 = vld [vmem:[%s2] sm:$0x1]
  %v42 = vlaneseq
  %v43 = vshrl.u32 %v42, 7
  %v44 = vsub.s32 0, %v43
  %v45 = vrot.slane %v40, %v44
  %v63 = vunpack.c.l.b16 %v24
  %v64 = vunpack.c.l.b16 %v25
  %v65 = vunpack.c.l.b16 %v26
  %v66 = vunpack.c.l.b16 %v27
  %v67 = vunpack.c.l.b16 %v28
  %v68 = vunpack.c.l.b16 %v29
  %v69 = vunpack.c.l.b16 %v30
  %v70 = vunpack.c.l.b16 %v31
  %v71 = vunpack.c.l.b16 %v32
  %v72 = vunpack.c.l.b16 %v33
  %v73 = vunpack.c.l.b16 %v34
  %v74 = vunpack.c.l.b16 %v35
  %v75 = vunpack.c.l.b16 %v36
  %v76 = vunpack.c.l.b16 %v37
  %v77 = vunpack.c.l.b16 %v38
  %v78 = vunpack.c.l.b16 %v39
  %v79 = vpack.c.b16 %v64, %v63
  %v80 = vpack.c.b16 %v66, %v65
  %v81 = vpack.c.b16 %v68, %v67
  %v82 = vpack.c.b16 %v70, %v69
  %v83 = vpack.c.b16 %v72, %v71
  %v84 = vpack.c.b16 %v74, %v73
  %v85 = vpack.c.b16 %v76, %v75
  %v86 = vpack.c.b16 %v78, %v77
  %95 = vmatprep.subr.bf16.mxu0 0
  %96 = vmatpush1.bf16.msra.mxu0 %v79
  %97 = vmatprep.subr.bf16.mxu0 0
  %98 = vmatpush1.bf16.msra.mxu0 %v80
  %99 = vmatprep.subr.bf16.mxu0 0
  %100 = vmatpush1.bf16.msra.mxu0 %v81
  %101 = vmatprep.subr.bf16.mxu0 0
  %102 = vmatpush1.bf16.msra.mxu0 %v82
  %103 = vmatprep.subr.bf16.mxu0 0
  %104 = vmatpush1.bf16.msra.mxu0 %v83
  %105 = vmatprep.subr.bf16.mxu0 0
  %106 = vmatpush1.bf16.msra.mxu0 %v84
  %107 = vmatprep.subr.bf16.mxu0 0
  %108 = vmatpush1.bf16.msra.mxu0 %v85
  %109 = vmatprep.subr.bf16.mxu0 0
  %110 = vmatpush1.bf16.msra.mxu0 %v86
  %111 = vmatprep.subr.bf16.mxu0 0
  %112 = vmatpush1.bf16.msra.mxu0 0
  %113 = vmatprep.subr.bf16.mxu0 0
  %114 = vmatpush1.bf16.msra.mxu0 0
  %115 = vmatprep.subr.bf16.mxu0 0
  %116 = vmatpush1.bf16.msra.mxu0 0
  %117 = vmatprep.subr.bf16.mxu0 0
  %118 = vmatpush1.bf16.msra.mxu0 0
  %119 = vmatprep.subr.bf16.mxu0 0
  %120 = vmatpush1.bf16.msra.mxu0 0
  %121 = vmatprep.subr.bf16.mxu0 0
  %122 = vmatpush1.bf16.msra.mxu0 0
  %123 = vmatprep.subr.bf16.mxu0 0
  %124 = vmatpush1.bf16.msra.mxu0 0
  %125 = vmatprep.subr.bf16.mxu0 0
  %126 = vmatpush1.bf16.msra.mxu0 0
  %127 = vmatprep.mubr.bf16.mxu0 0
  %128 = vmatmul.mubr.bf16.gmra.mrb[0].mxu0 %v23
  %v129 = vpop.f32.mrb[0].mxu0
  %v130 = vadd.f32 %v45, %v129
  %v131 = vpop.f32.mrb[0].mxu0
  %v132 = vpop.f32.mrb[0].mxu0
  %v133 = vadd.f32 %v45, %v132
  %v134 = vpop.f32.mrb[0].mxu0
  %135 = vdwg.mxu0
  %v136 = vmax.f32 %v130, 0.0
  %v137 = vmax.f32 %v133, 0.0
  %v138 = vpack.c.bf16 %v137, %v136
  %v139 = vld [vmem:[%s3] sm:$0xf]
  %v140 = vld [vmem:[%s3 + $0x4] sm:$0xf]
  %v141 = vld [vmem:[%s3 + $0x8] sm:$0xf]
  %v142 = vld [vmem:[%s3 + $0xc] sm:$0xf]
  %v143 = vld [vmem:[%s4] sm:$0x1]
  %v145 = vlaneseq
  %v146 = vshrl.u32 %v145, 7
  %v147 = vsub.s32 0, %v146
  %v148 = vrot.slane %v143, %v147
  %v154 = vunpack.c.l.b16 %v139
  %v155 = vunpack.c.l.b16 %v140
  %v156 = vunpack.c.l.b16 %v141
  %v157 = vunpack.c.l.b16 %v142
  %v158 = vpack.c.b16 %v155, %v154
  %v159 = vpack.c.b16 %v157, %v156
  %vm162 = vcmask 261120
  %v164 = vsel %vm162, %v138, 0
  %166 = vmatprep.subr.bf16.mxu0 0
  %167 = vmatpush1.bf16.msra.mxu0 %v158
  %168 = vmatprep.subr.bf16.mxu0 0
  %169 = vmatpush1.bf16.msra.mxu0 %v159
  %170 = vmatprep.subr.bf16.mxu0 0
  %171 = vmatpush1.bf16.msra.mxu0 0
  %172 = vmatprep.subr.bf16.mxu0 0
  %173 = vmatpush1.bf16.msra.mxu0 0
  %174 = vmatprep.subr.bf16.mxu0 0
  %175 = vmatpush1.bf16.msra.mxu0 0
  %176 = vmatprep.subr.bf16.mxu0 0
  %177 = vmatpush1.bf16.msra.mxu0 0
  %178 = vmatprep.subr.bf16.mxu0 0
  %179 = vmatpush1.bf16.msra.mxu0 0
  %180 = vmatprep.subr.bf16.mxu0 0
  %181 = vmatpush1.bf16.msra.mxu0 0
  %182 = vmatprep.subr.bf16.mxu0 0
  %183 = vmatpush1.bf16.msra.mxu0 0
  %184 = vmatprep.subr.bf16.mxu0 0
  %185 = vmatpush1.bf16.msra.mxu0 0
  %186 = vmatprep.subr.bf16.mxu0 0
  %187 = vmatpush1.bf16.msra.mxu0 0
  %188 = vmatprep.subr.bf16.mxu0 0
  %189 = vmatpush1.bf16.msra.mxu0 0
  %190 = vmatprep.subr.bf16.mxu0 0
  %191 = vmatpush1.bf16.msra.mxu0 0
  %192 = vmatprep.subr.bf16.mxu0 0
  %193 = vmatpush1.bf16.msra.mxu0 0
  %194 = vmatprep.subr.bf16.mxu0 0
  %195 = vmatpush1.bf16.msra.mxu0 0
  %196 = vmatprep.subr.bf16.mxu0 0
  %197 = vmatpush1.bf16.msra.mxu0 0
  %198 = vmatprep.mubr.bf16.mxu0 0
  %199 = vmatmul.mubr.bf16.gmra.mrb[0].mxu0 %v164
  %v200 = vpop.f32.mrb[0].mxu0
  %v201 = vadd.f32 %v148, %v200
  %v202 = vpop.f32.mrb[0].mxu0
  %v203 = vpop.f32.mrb[0].mxu0
  %v204 = vadd.f32 %v148, %v203
  %v205 = vpop.f32.mrb[0].mxu0
  %206 = vdwg.mxu0
  %207 = vst.msk [vmem:[%s5] sm:$0xff] %vm162, %v201
  %208 = vst.msk [vmem:[%s5 + $0x8] sm:$0xff] %vm162, %v204
  // Predicated region
  $region22: #{full_transformer_encoder.6} parent=0 // pred_check
    _
  $region23: #{full_transformer_encoder.6} parent=0 // pred_check_branch
    %210 = sbr.rel (0) target = $region25
  $region24: #{full_transformer_encoder.6} parent=0 // pred_region
    _
  $region25: #{full_transformer_encoder.6} parent=0 // pred_fallthru
    _
  // Predicated region
  $region26: #{full_transformer_encoder.6} parent=0 // pred_check
    _
  $region27: #{full_transformer_encoder.6} parent=0 // pred_check_branch
    %212 = sbr.rel (0) target = $region29
  $region28: #{full_transformer_encoder.6} parent=0 // pred_region
    _
  $region29: #{full_transformer_encoder.6} parent=0 // pred_fallthru
    _

// kernel: full_transformer_encoder.11
$region0: #{full_transformer_encoder.11}
  #allocation0 [shape = 'u32[]', space=smem, size = 0x4, offset = 0x4, fixed_abs, tag = 'smem constant byte address 0x4 - core index']
  #allocation1 [shape = 'u32[144,128]{1,0:T(1,128)}', space=vmem, size = 0x12000, scoped, tag = 'internal scratch']
  %s0 = inlined_call_operand.vmem [shape: f32[16,32], index: 0, kind: input, shape index: {}]
  %s1 = inlined_call_operand.vmem [shape: f32[1,32], index: 1, kind: input, shape index: {}]
  %s2 = inlined_call_operand.vmem [shape: f32[1,32], index: 2, kind: input, shape index: {}]
  %s3 = inlined_call_operand.vmem [shape: bf16[32,32], index: 3, kind: input, shape index: {}]
  %s4 = inlined_call_operand.vmem [shape: f32[1,32], index: 4, kind: input, shape index: {}]
  %s5 = inlined_call_operand.vmem [shape: bf16[32,128], index: 5, kind: input, shape index: {}]
  %s6 = inlined_call_operand.vmem [shape: f32[1,128], index: 6, kind: input, shape index: {}]
  %s7 = inlined_call_operand.vmem [shape: f32[16,128], index: 7, kind: output, shape index: {}]
  %s8 = sld [smem:[#allocation0]]
  $region38: #{full_transformer_encoder.11} parent=0
    _
  %s10 = ssub.s32 1, %s8
  %s11 = scalar_select 0, %s10, %s8
  // Predicated region
  $region2: #{full_transformer_encoder.11} parent=0 // pred_check
    _
  $region3: #{full_transformer_encoder.11} parent=0 // pred_check_branch
    %13 = sbr.rel (0) target = $region5
  $region4: #{full_transformer_encoder.11} parent=0 // pred_region
    _
  $region5: #{full_transformer_encoder.11} parent=0 // pred_fallthru
    _
  // Predicated region
  $region6: #{full_transformer_encoder.11} parent=0 // pred_check
    _
  $region7: #{full_transformer_encoder.11} parent=0 // pred_check_branch
    %15 = sbr.rel (0) target = $region9
  $region8: #{full_transformer_encoder.11} parent=0 // pred_region
    _
  $region9: #{full_transformer_encoder.11} parent=0 // pred_fallthru
    _
  // Predicated region
  $region10: #{full_transformer_encoder.11} parent=0 // pred_check
    _
  $region11: #{full_transformer_encoder.11} parent=0 // pred_check_branch
    %17 = sbr.rel (0) target = $region13
  $region12: #{full_transformer_encoder.11} parent=0 // pred_region
    _
  $region13: #{full_transformer_encoder.11} parent=0 // pred_fallthru
    _
  // Predicated region
  $region14: #{full_transformer_encoder.11} parent=0 // pred_check
    _
  $region15: #{full_transformer_encoder.11} parent=0 // pred_check_branch
    %19 = sbr.rel (0) target = $region17
  $region16: #{full_transformer_encoder.11} parent=0 // pred_region
    _
  $region17: #{full_transformer_encoder.11} parent=0 // pred_fallthru
    _
  // Predicated region
  $region18: #{full_transformer_encoder.11} parent=0 // pred_check
    _
  $region19: #{full_transformer_encoder.11} parent=0 // pred_check_branch
    %21 = sbr.rel (0) target = $region21
  $region20: #{full_transformer_encoder.11} parent=0 // pred_region
    _
  $region21: #{full_transformer_encoder.11} parent=0 // pred_fallthru
    _
  // Predicated region
  $region22: #{full_transformer_encoder.11} parent=0 // pred_check
    _
  $region23: #{full_transformer_encoder.11} parent=0 // pred_check_branch
    %23 = sbr.rel (0) target = $region25
  $region24: #{full_transformer_encoder.11} parent=0 // pred_region
    _
  $region25: #{full_transformer_encoder.11} parent=0 // pred_fallthru
    _
  // Predicated region
  $region26: #{full_transformer_encoder.11} parent=0 // pred_check
    _
  $region27: #{full_transformer_encoder.11} parent=0 // pred_check_branch
    %25 = sbr.rel (0) target = $region29
  $region28: #{full_transformer_encoder.11} parent=0 // pred_region
    _
  $region29: #{full_transformer_encoder.11} parent=0 // pred_fallthru
    _
  %v27 = vld [vmem:[%s0] sm:$0xff]
  %v28 = vld [vmem:[%s0 + $0x8] sm:$0xff]
  %v29 = vld [vmem:[%s1] sm:$0x1]
  %v30 = vld [vmem:[%s2] sm:$0x1]
  %vm31 = vcmask 261120
  %v32 = vsel %vm31, %v27, 0.0
  %33 = vadd.xlane.f32.xlu0 %v32
  %v34 = vpop.xlane.xlu0 %33
  %v35 = vsel %vm31, %v28, 0.0
  %36 = vadd.xlane.f32.xlu0 %v35
  %v37 = vpop.xlane.xlu0 %36
  %v38 = vrcp.pop 32.0
  %v39 = vmul.f32 %v34, %v38
  %v40 = vmul.f32 %v37, %v38
  %v41 = vsub.f32 %v27, %v39
  %v42 = vsub.f32 %v28, %v40
  %v43 = vmul.f32 %v41, %v41
  %v44 = vmul.f32 %v42, %v42
  %v45 = vsel %vm31, %v43, 0.0
  %46 = vadd.xlane.f32.xlu0 %v45
  %v47 = vpop.xlane.xlu0 %46
  %v48 = vsel %vm31, %v44, 0.0
  %49 = vadd.xlane.f32.xlu0 %v48
  %v50 = vpop.xlane.xlu0 %49
  %v51 = vmul.f32 %v47, %v38
  %v52 = vmul.f32 %v50, %v38
  %v53 = vadd.f32 %v51, 1e-05
  %v54 = vadd.f32 %v52, 1e-05
  %v55 = vrsqrt.pop %v53
  %v56 = vrsqrt.pop %v54
  %v57 = vmul.f32 %v41, %v55
  %v58 = vmul.f32 %v42, %v56
  %v60 = vlaneseq
  %v61 = vshrl.u32 %v60, 7
  %v62 = vsub.s32 0, %v61
  %v63 = vrot.slane %v29, %v62
  %v65 = vmul.f32 %v57, %v63
  %v66 = vmul.f32 %v58, %v63
  %v68 = vlaneseq
  %v69 = vshrl.u32 %v68, 7
  %v70 = vsub.s32 0, %v69
  %v71 = vrot.slane %v30, %v70
  %v73 = vadd.f32 %v65, %v71
  %v74 = vadd.f32 %v66, %v71
  %v75 = vpack.c.bf16 %v74, %v73
  %v76 = vld [vmem:[%s3] sm:$0xf]
  %v77 = vld [vmem:[%s3 + $0x4] sm:$0xf]
  %v78 = vld [vmem:[%s3 + $0x8] sm:$0xf]
  %v79 = vld [vmem:[%s3 + $0xc] sm:$0xf]
  %v80 = vld [vmem:[%s4] sm:$0x1]
  %v82 = vlaneseq
  %v83 = vshrl.u32 %v82, 7
  %v84 = vsub.s32 0, %v83
  %v85 = vrot.slane %v80, %v84
  %v91 = vunpack.c.l.b16 %v76
  %v92 = vunpack.c.l.b16 %v77
  %v93 = vunpack.c.l.b16 %v78
  %v94 = vunpack.c.l.b16 %v79
  %v95 = vpack.c.b16 %v92, %v91
  %v96 = vpack.c.b16 %v94, %v93
  %v100 = vsel %vm31, %v75, 0
  %102 = vmatprep.subr.bf16.mxu0 0
  %103 = vmatpush1.bf16.msra.mxu0 %v95
  %104 = vmatprep.subr.bf16.mxu0 0
  %105 = vmatpush1.bf16.msra.mxu0 %v96
  %106 = vmatprep.subr.bf16.mxu0 0
  %107 = vmatpush1.bf16.msra.mxu0 0
  %108 = vmatprep.subr.bf16.mxu0 0
  %109 = vmatpush1.bf16.msra.mxu0 0
  %110 = vmatprep.subr.bf16.mxu0 0
  %111 = vmatpush1.bf16.msra.mxu0 0
  %112 = vmatprep.subr.bf16.mxu0 0
  %113 = vmatpush1.bf16.msra.mxu0 0
  %114 = vmatprep.subr.bf16.mxu0 0
  %115 = vmatpush1.bf16.msra.mxu0 0
  %116 = vmatprep.subr.bf16.mxu0 0
  %117 = vmatpush1.bf16.msra.mxu0 0
  %118 = vmatprep.subr.bf16.mxu0 0
  %119 = vmatpush1.bf16.msra.mxu0 0
  %120 = vmatprep.subr.bf16.mxu0 0
  %121 = vmatpush1.bf16.msra.mxu0 0
  %122 = vmatprep.subr.bf16.mxu0 0
  %123 = vmatpush1.bf16.msra.mxu0 0
  %124 = vmatprep.subr.bf16.mxu0 0
  %125 = vmatpush1.bf16.msra.mxu0 0
  %126 = vmatprep.subr.bf16.mxu0 0
  %127 = vmatpush1.bf16.msra.mxu0 0
  %128 = vmatprep.subr.bf16.mxu0 0
  %129 = vmatpush1.bf16.msra.mxu0 0
  %130 = vmatprep.subr.bf16.mxu0 0
  %131 = vmatpush1.bf16.msra.mxu0 0
  %132 = vmatprep.subr.bf16.mxu0 0
  %133 = vmatpush1.bf16.msra.mxu0 0
  %134 = vmatprep.mubr.bf16.mxu0 0
  %135 = vmatmul.mubr.bf16.gmra.mrb[0].mxu0 %v100
  %v136 = vpop.f32.mrb[0].mxu0
  %v137 = vadd.f32 %v85, %v136
  %v138 = vpop.f32.mrb[0].mxu0
  %v139 = vpop.f32.mrb[0].mxu0
  %v140 = vadd.f32 %v85, %v139
  %v141 = vpop.f32.mrb[0].mxu0
  %142 = vdwg.mxu0
  %v143 = vmax.f32 %v137, 0.0
  %v144 = vmax.f32 %v140, 0.0
  %v145 = vpack.c.bf16 %v144, %v143
  %v146 = vld [vmem:[%s5] sm:$0xf]
  %v147 = vld [vmem:[%s5 + $0x4] sm:$0xf]
  %v148 = vld [vmem:[%s5 + $0x8] sm:$0xf]
  %v149 = vld [vmem:[%s5 + $0xc] sm:$0xf]
  %v150 = vld [vmem:[%s6] sm:$0x1]
  %v152 = vlaneseq
  %v153 = vshrl.u32 %v152, 7
  %v154 = vsub.s32 0, %v153
  %v155 = vrot.slane %v150, %v154
  %v161 = vunpack.c.l.b16 %v146
  %v162 = vunpack.c.l.b16 %v147
  %v163 = vunpack.c.l.b16 %v148
  %v164 = vunpack.c.l.b16 %v149
  %v165 = vpack.c.b16 %v162, %v161
  %v166 = vpack.c.b16 %v164, %v163
  %v170 = vsel %vm31, %v145, 0
  %172 = vmatprep.subr.bf16.mxu0 0
  %173 = vmatpush1.bf16.msra.mxu0 %v165
  %174 = vmatprep.subr.bf16.mxu0 0
  %175 = vmatpush1.bf16.msra.mxu0 %v166
  %176 = vmatprep.subr.bf16.mxu0 0
  %177 = vmatpush1.bf16.msra.mxu0 0
  %178 = vmatprep.subr.bf16.mxu0 0
  %179 = vmatpush1.bf16.msra.mxu0 0
  %180 = vmatprep.subr.bf16.mxu0 0
  %181 = vmatpush1.bf16.msra.mxu0 0
  %182 = vmatprep.subr.bf16.mxu0 0
  %183 = vmatpush1.bf16.msra.mxu0 0
  %184 = vmatprep.subr.bf16.mxu0 0
  %185 = vmatpush1.bf16.msra.mxu0 0
  %186 = vmatprep.subr.bf16.mxu0 0
  %187 = vmatpush1.bf16.msra.mxu0 0
  %188 = vmatprep.subr.bf16.mxu0 0
  %189 = vmatpush1.bf16.msra.mxu0 0
  %190 = vmatprep.subr.bf16.mxu0 0
  %191 = vmatpush1.bf16.msra.mxu0 0
  %192 = vmatprep.subr.bf16.mxu0 0
  %193 = vmatpush1.bf16.msra.mxu0 0
  %194 = vmatprep.subr.bf16.mxu0 0
  %195 = vmatpush1.bf16.msra.mxu0 0
  %196 = vmatprep.subr.bf16.mxu0 0
  %197 = vmatpush1.bf16.msra.mxu0 0
  %198 = vmatprep.subr.bf16.mxu0 0
  %199 = vmatpush1.bf16.msra.mxu0 0
  %200 = vmatprep.subr.bf16.mxu0 0
  %201 = vmatpush1.bf16.msra.mxu0 0
  %202 = vmatprep.subr.bf16.mxu0 0
  %203 = vmatpush1.bf16.msra.mxu0 0
  %204 = vmatprep.mubr.bf16.mxu0 0
  %205 = vmatmul.mubr.bf16.gmra.mrb[0].mxu0 %v170
  %v206 = vpop.f32.mrb[0].mxu0
  %v207 = vadd.f32 %v155, %v206
  %v208 = vpop.f32.mrb[0].mxu0
  %v209 = vpop.f32.mrb[0].mxu0
  %v210 = vadd.f32 %v155, %v209
  %v211 = vpop.f32.mrb[0].mxu0
  %212 = vdwg.mxu0
  %213 = vst [vmem:[%s7] sm:$0xff] %v207
  %214 = vst [vmem:[%s7 + $0x8] sm:$0xff] %v210
  // Predicated region
  $region30: #{full_transformer_encoder.11} parent=0 // pred_check
    _
  $region31: #{full_transformer_encoder.11} parent=0 // pred_check_branch
    %216 = sbr.rel (0) target = $region33
  $region32: #{full_transformer_encoder.11} parent=0 // pred_region
    _
  $region33: #{full_transformer_encoder.11} parent=0 // pred_fallthru
    _
  // Predicated region
  $region34: #{full_transformer_encoder.11} parent=0 // pred_check
    _
  $region35: #{full_transformer_encoder.11} parent=0 // pred_check_branch
    %218 = sbr.rel (0) target = $region37
  $region36: #{full_transformer_encoder.11} parent=0 // pred_region
    _
  $region37: #{full_transformer_encoder.11} parent=0 // pred_fallthru
    _

// kernel: full_transformer_encoder.7
$region0: #{full_transformer_encoder.7}
  #allocation0 [shape = 'u32[]', space=smem, size = 0x4, offset = 0x4, fixed_abs, tag = 'smem constant byte address 0x4 - core index']
  #allocation1 [shape = 'u32[144,128]{1,0:T(1,128)}', space=vmem, size = 0x12000, scoped, tag = 'internal scratch']
  %s0 = inlined_call_operand.vmem [shape: f32[16,32], index: 0, kind: input, shape index: {}]
  %s1 = inlined_call_operand.vmem [shape: f32[1,32], index: 1, kind: input, shape index: {}]
  %s2 = inlined_call_operand.vmem [shape: f32[1,32], index: 2, kind: input, shape index: {}]
  %s3 = inlined_call_operand.vmem [shape: bf16[32,96], index: 3, kind: input, shape index: {}]
  %s4 = inlined_call_operand.vmem [shape: f32[1,96], index: 4, kind: input, shape index: {}]
  %s5 = inlined_call_operand.vmem [shape: bf16[16,32], index: 5, kind: output, shape index: {0}]
  %s6 = inlined_call_operand.vmem [shape: bf16[16,32], index: 6, kind: output, shape index: {1}]
  %s7 = inlined_call_operand.vmem [shape: bf16[16,32], index: 7, kind: output, shape index: {2}]
  %8 = xla_tuple %s5, %s6, %s7
  %s9 = sld [smem:[#allocation0]]
  $region46: #{full_transformer_encoder.7} parent=0
    _
  %s11 = ssub.s32 1, %s9
  %s12 = scalar_select 0, %s11, %s9
  // Predicated region
  $region2: #{full_transformer_encoder.7} parent=0 // pred_check
    _
  $region3: #{full_transformer_encoder.7} parent=0 // pred_check_branch
    %14 = sbr.rel (0) target = $region5
  $region4: #{full_transformer_encoder.7} parent=0 // pred_region
    _
  $region5: #{full_transformer_encoder.7} parent=0 // pred_fallthru
    _
  // Predicated region
  $region6: #{full_transformer_encoder.7} parent=0 // pred_check
    _
  $region7: #{full_transformer_encoder.7} parent=0 // pred_check_branch
    %16 = sbr.rel (0) target = $region9
  $region8: #{full_transformer_encoder.7} parent=0 // pred_region
    _
  $region9: #{full_transformer_encoder.7} parent=0 // pred_fallthru
    _
  // Predicated region
  $region10: #{full_transformer_encoder.7} parent=0 // pred_check
    _
  $region11: #{full_transformer_encoder.7} parent=0 // pred_check_branch
    %18 = sbr.rel (0) target = $region13
  $region12: #{full_transformer_encoder.7} parent=0 // pred_region
    _
  $region13: #{full_transformer_encoder.7} parent=0 // pred_fallthru
    _
  // Predicated region
  $region14: #{full_transformer_encoder.7} parent=0 // pred_check
    _
  $region15: #{full_transformer_encoder.7} parent=0 // pred_check_branch
    %20 = sbr.rel (0) target = $region17
  $region16: #{full_transformer_encoder.7} parent=0 // pred_region
    _
  $region17: #{full_transformer_encoder.7} parent=0 // pred_fallthru
    _
  // Predicated region
  $region18: #{full_transformer_encoder.7} parent=0 // pred_check
    _
  $region19: #{full_transformer_encoder.7} parent=0 // pred_check_branch
    %22 = sbr.rel (0) target = $region21
  $region20: #{full_transformer_encoder.7} parent=0 // pred_region
    _
  $region21: #{full_transformer_encoder.7} parent=0 // pred_fallthru
    _
  %v24 = vld [vmem:[%s0] sm:$0xff]
  %v25 = vld [vmem:[%s0 + $0x8] sm:$0xff]
  %v26 = vld [vmem:[%s1] sm:$0x1]
  %v27 = vld [vmem:[%s2] sm:$0x1]
  %vm28 = vcmask 261120
  %v29 = vsel %vm28, %v24, 0.0
  %30 = vadd.xlane.f32.xlu0 %v29
  %v31 = vpop.xlane.xlu0 %30
  %v32 = vsel %vm28, %v25, 0.0
  %33 = vadd.xlane.f32.xlu0 %v32
  %v34 = vpop.xlane.xlu0 %33
  %v35 = vrcp.pop 32.0
  %v36 = vmul.f32 %v31, %v35
  %v37 = vmul.f32 %v34, %v35
  %v38 = vsub.f32 %v24, %v36
  %v39 = vsub.f32 %v25, %v37
  %v40 = vmul.f32 %v38, %v38
  %v41 = vmul.f32 %v39, %v39
  %v42 = vsel %vm28, %v40, 0.0
  %43 = vadd.xlane.f32.xlu0 %v42
  %v44 = vpop.xlane.xlu0 %43
  %v45 = vsel %vm28, %v41, 0.0
  %46 = vadd.xlane.f32.xlu0 %v45
  %v47 = vpop.xlane.xlu0 %46
  %v48 = vmul.f32 %v44, %v35
  %v49 = vmul.f32 %v47, %v35
  %v50 = vadd.f32 %v48, 1e-05
  %v51 = vadd.f32 %v49, 1e-05
  %v52 = vrsqrt.pop %v50
  %v53 = vrsqrt.pop %v51
  %v54 = vmul.f32 %v38, %v52
  %v55 = vmul.f32 %v39, %v53
  %v57 = vlaneseq
  %v58 = vshrl.u32 %v57, 7
  %v59 = vsub.s32 0, %v58
  %v60 = vrot.slane %v26, %v59
  %v62 = vmul.f32 %v54, %v60
  %v63 = vmul.f32 %v55, %v60
  %v65 = vlaneseq
  %v66 = vshrl.u32 %v65, 7
  %v67 = vsub.s32 0, %v66
  %v68 = vrot.slane %v27, %v67
  %v70 = vadd.f32 %v62, %v68
  %v71 = vadd.f32 %v63, %v68
  %v72 = vpack.c.bf16 %v71, %v70
  %v73 = vld [vmem:[%s3] sm:$0xf]
  %v74 = vld [vmem:[%s3 + $0x4] sm:$0xf]
  %v75 = vld [vmem:[%s3 + $0x8] sm:$0xf]
  %v76 = vld [vmem:[%s3 + $0xc] sm:$0xf]
  %v77 = vld [vmem:[%s4] sm:$0x1]
  %v79 = vlaneseq
  %v80 = vshrl.u32 %v79, 7
  %v81 = vsub.s32 0, %v80
  %v82 = vrot.slane %v77, %v81
  %v88 = vunpack.c.l.b16 %v73
  %v89 = vunpack.c.l.b16 %v74
  %v90 = vunpack.c.l.b16 %v75
  %v91 = vunpack.c.l.b16 %v76
  %v92 = vpack.c.b16 %v89, %v88
  %v93 = vpack.c.b16 %v91, %v90
  %v97 = vsel %vm28, %v72, 0
  %99 = vmatprep.subr.bf16.mxu0 0
  %100 = vmatpush1.bf16.msra.mxu0 %v92
  %101 = vmatprep.subr.bf16.mxu0 0
  %102 = vmatpush1.bf16.msra.mxu0 %v93
  %103 = vmatprep.subr.bf16.mxu0 0
  %104 = vmatpush1.bf16.msra.mxu0 0
  %105 = vmatprep.subr.bf16.mxu0 0
  %106 = vmatpush1.bf16.msra.mxu0 0
  %107 = vmatprep.subr.bf16.mxu0 0
  %108 = vmatpush1.bf16.msra.mxu0 0
  %109 = vmatprep.subr.bf16.mxu0 0
  %110 = vmatpush1.bf16.msra.mxu0 0
  %111 = vmatprep.subr.bf16.mxu0 0
  %112 = vmatpush1.bf16.msra.mxu0 0
  %113 = vmatprep.subr.bf16.mxu0 0
  %114 = vmatpush1.bf16.msra.mxu0 0
  %115 = vmatprep.subr.bf16.mxu0 0
  %116 = vmatpush1.bf16.msra.mxu0 0
  %117 = vmatprep.subr.bf16.mxu0 0
  %118 = vmatpush1.bf16.msra.mxu0 0
  %119 = vmatprep.subr.bf16.mxu0 0
  %120 = vmatpush1.bf16.msra.mxu0 0
  %121 = vmatprep.subr.bf16.mxu0 0
  %122 = vmatpush1.bf16.msra.mxu0 0
  %123 = vmatprep.subr.bf16.mxu0 0
  %124 = vmatpush1.bf16.msra.mxu0 0
  %125 = vmatprep.subr.bf16.mxu0 0
  %126 = vmatpush1.bf16.msra.mxu0 0
  %127 = vmatprep.subr.bf16.mxu0 0
  %128 = vmatpush1.bf16.msra.mxu0 0
  %129 = vmatprep.subr.bf16.mxu0 0
  %130 = vmatpush1.bf16.msra.mxu0 0
  %131 = vmatprep.mubr.bf16.mxu0 0
  %132 = vmatmul.mubr.bf16.gmra.mrb[0].mxu0 %v97
  %v133 = vpop.f32.mrb[0].mxu0
  %v134 = vadd.f32 %v82, %v133
  %v135 = vpop.f32.mrb[0].mxu0
  %v136 = vpop.f32.mrb[0].mxu0
  %v137 = vadd.f32 %v82, %v136
  %v138 = vpop.f32.mrb[0].mxu0
  %139 = vdwg.mxu0
  %v140 = vpack.c.bf16 %v137, %v134
  %v142 = vunpack.c.l.b16 %v140
  %v143 = vunpack.c.h.b16 %v140
  %v144 = vpack.c.b16 %v142, %v142
  %v145 = vpack.c.b16 %v143, %v143
  %vm148 = vcmask 257024
  %149 = vst.msk [vmem:[%s5] sm:$0xf] %vm148, %v144
  %150 = vst.msk [vmem:[%s5 + $0x4] sm:$0xf] %vm148, %v145
  %151 = vrot.lane.b32.xlu0 %v144, 96
  %v152 = vpop.permute.xlu0 %151
  %153 = vrot.lane.b32.xlu0 %v145, 96
  %v154 = vpop.permute.xlu0 %153
  %157 = vst.msk [vmem:[%s6] sm:$0xf] %vm148, %v152
  %158 = vst.msk [vmem:[%s6 + $0x4] sm:$0xf] %vm148, %v154
  %159 = vrot.lane.b32.xlu0 %v144, 64
  %v160 = vpop.permute.xlu0 %159
  %161 = vrot.lane.b32.xlu0 %v145, 64
  %v162 = vpop.permute.xlu0 %161
  %165 = vst.msk [vmem:[%s7] sm:$0xf] %vm148, %v160
  %166 = vst.msk [vmem:[%s7 + $0x4] sm:$0xf] %vm148, %v162
  // Predicated region
  $region22: #{full_transformer_encoder.7} parent=0 // pred_check
    _
  $region23: #{full_transformer_encoder.7} parent=0 // pred_check_branch
    %168 = sbr.rel (0) target = $region25
  $region24: #{full_transformer_encoder.7} parent=0 // pred_region
    _
  $region25: #{full_transformer_encoder.7} parent=0 // pred_fallthru
    _
  // Predicated region
  $region26: #{full_transformer_encoder.7} parent=0 // pred_check
    _
  $region27: #{full_transformer_encoder.7} parent=0 // pred_check_branch
    %170 = sbr.rel (0) target = $region29
  $region28: #{full_transformer_encoder.7} parent=0 // pred_region
    _
  $region29: #{full_transformer_encoder.7} parent=0 // pred_fallthru
    _
  // Predicated region
  $region30: #{full_transformer_encoder.7} parent=0 // pred_check
    _
  $region31: #{full_transformer_encoder.7} parent=0 // pred_check_branch
    %172 = sbr.rel (0) target = $region33
  $region32: #{full_transformer_encoder.7} parent=0 // pred_region
    _
  $region33: #{full_transformer_encoder.7} parent=0 // pred_fallthru
    _
  // Predicated region
  $region34: #{full_transformer_encoder.7} parent=0 // pred_check
    _
  $region35: #{full_transformer_encoder.7} parent=0 // pred_check_branch
    %174 = sbr.rel (0) target = $region37
  $region36: #{full_transformer_encoder.7} parent=0 // pred_region
    _
  $region37: #{full_transformer_encoder.7} parent=0 // pred_fallthru
    _
  // Predicated region
  $region38: #{full_transformer_encoder.7} parent=0 // pred_check
    _
  $region39: #{full_transformer_encoder.7} parent=0 // pred_check_branch
    %176 = sbr.rel (0) target = $region41
  $region40: #{full_transformer_encoder.7} parent=0 // pred_region
    _
  $region41: #{full_transformer_encoder.7} parent=0 // pred_fallthru
    _
  // Predicated region
  $region42: #{full_transformer_encoder.7} parent=0 // pred_check
    _
  $region43: #{full_transformer_encoder.7} parent=0 // pred_check_branch
    %178 = sbr.rel (0) target = $region45
  $region44: #{full_transformer_encoder.7} parent=0 // pred_region
    _
  $region45: #{full_transformer_encoder.7} parent=0 // pred_fallthru
    _

// kernel: full_transformer_encoder.8
$region0: #{full_transformer_encoder.8}
  #allocation0 [shape = 'u32[]', space=smem, size = 0x4, offset = 0x4, fixed_abs, tag = 'smem constant byte address 0x4 - core index']
  #allocation1 [shape = 'u32[144,128]{1,0:T(1,128)}', space=vmem, size = 0x12000, scoped, tag = 'internal scratch']
  #allocation2 [shape = 'f32[2,8,1]{2,1,0:T(8,128)}', space=vmem, size = 0x2000, scoped, tag = 'scratch operand']
  #allocation3 [shape = 'f32[2,8,1]{2,1,0:T(8,128)}', space=vmem, size = 0x2000, scoped, tag = 'scratch operand']
  #allocation4 [shape = 'f32[2,8,16]{2,1,0:T(8,128)}', space=vmem, size = 0x2000, scoped, tag = 'scratch operand']
  %s0 = inlined_call_operand.vmem [shape: bf16[2,8,32], index: 0, kind: input, shape index: {}]
  %s1 = inlined_call_operand.vmem [shape: bf16[2,8,32], index: 1, kind: input, shape index: {}]
  %s2 = inlined_call_operand.vmem [shape: bf16[2,8,32], index: 2, kind: input, shape index: {}]
  %s3 = inlined_call_operand.vmem [shape: f32[2,8,32], index: 3, kind: input, shape index: {}, may-alias: {3,14}]
  %s4 = inlined_call_operand.vmem [shape: bf16[32,32], index: 4, kind: input, shape index: {}]
  %s5 = inlined_call_operand.vmem [shape: f32[1,32], index: 5, kind: input, shape index: {}]
  %s6 = inlined_call_operand.vmem [shape: f32[1,32], index: 6, kind: input, shape index: {}]
  %s7 = inlined_call_operand.vmem [shape: f32[1,32], index: 7, kind: input, shape index: {}]
  %s8 = inlined_call_operand.vmem [shape: f32[1,32], index: 8, kind: input, shape index: {}]
  %s9 = inlined_call_operand.vmem [shape: f32[1,32], index: 9, kind: input, shape index: {}]
  %s10 = inlined_call_operand.vmem [shape: bf16[32,32], index: 10, kind: input, shape index: {}]
  %s11 = inlined_call_operand.vmem [shape: f32[1,32], index: 11, kind: input, shape index: {}]
  %s12 = inlined_call_operand.vmem [shape: bf16[32,32], index: 12, kind: input, shape index: {}]
  %s13 = inlined_call_operand.vmem [shape: f32[1,32], index: 13, kind: input, shape index: {}]
  %s14 = inlined_call_operand.vmem [shape: f32[2,8,32], index: 14, kind: output, shape index: {}, may-alias: {3,14}]
  %s15 = sld [smem:[#allocation0]]
  $region97: #{full_transformer_encoder.8} parent=0
    _
  %s17 = ssub.s32 1, %s15
  %s18 = scalar_select 0, %s17, %s15
  loop: start=0, step=1, limit=4
  $region2: #{full_transformer_encoder.8} parent=0 // loop_pre_header
    _
  $region3: #{full_transformer_encoder.8} parent=0 // loop_header
    %s20 = sphi 0, %s24
    %p21 = scmp.ge.s32.totalorder %s20, 4
    %s27 = sphi 0, %s46
    %s28 = sphi 0, %s42
    %s29 = sphi 0, %s38
    %s30 = sphi 0, %s27
    %s31 = sphi 0, %s28
    %s32 = sphi 0, %s29
    %s33 = sphi 0, %s30
    %s34 = sphi 0, %s31
    %s35 = sphi 0, %s32
    %s51 = sphi 0, %s53
    %s54 = sphi 0, %s51
    %s55 = sphi 0, %s54
    %s71 = sphi 0, %s55
    %s79 = sphi 0, %s81
    %s82 = sphi 0, %s79
    %s83 = sphi 0, %s82
    %s99 = sphi 0, %s83
    %s107 = sphi 0, %s109
    %s110 = sphi 0, %s107
    %s111 = sphi 0, %s110
    %s127 = sphi 0, %s111
    %s135 = sphi 0, %s137
    %s138 = sphi 0, %s135
    %s139 = sphi 0, %s138
    %s155 = sphi 0, %s139
    %s159 = sphi 0, %s159
    %s161 = sphi 0, %s159
    %s162 = sphi 0, %s161
    %s176 = sphi 0, %s162
    %s180 = sphi 0, %s180
    %s182 = sphi 0, %s180
    %s183 = sphi 0, %s182
    %s197 = sphi 0, %s183
    %s201 = sphi 0, %s201
    %s203 = sphi 0, %s201
    %s204 = sphi 0, %s203
    %s218 = sphi 0, %s204
    %s222 = sphi 0, %s222
    %s224 = sphi 0, %s222
    %s225 = sphi 0, %s224
    %s239 = sphi 0, %s225
    %s243 = sphi 0, %s243
    %s245 = sphi 0, %s243
    %s246 = sphi 0, %s245
    %s260 = sphi 0, %s246
    %s264 = sphi 0, %s264
    %s266 = sphi 0, %s264
    %s267 = sphi 0, %s266
    %s281 = sphi 0, %s267
    %s285 = sphi 0, %s285
    %s287 = sphi 0, %s285
    %s288 = sphi 0, %s287
    %s302 = sphi 0, %s288
    %s306 = sphi 0, %s306
    %s308 = sphi 0, %s306
    %s309 = sphi 0, %s308
    %s323 = sphi 0, %s309
    %s327 = sphi 0, %s327
    %s329 = sphi 0, %s327
    %s330 = sphi 0, %s329
    %s344 = sphi 0, %s330
    %s348 = sphi 0, %s348
    %s350 = sphi 0, %s348
    %s351 = sphi 0, %s350
    %s365 = sphi 0, %s351
    %s373 = sphi 0, %s375
    %s376 = sphi 0, %s373
    %s377 = sphi 0, %s376
    %s393 = sphi 0, %s377
  $region4: #{full_transformer_encoder.8} parent=0 // loop_header_branch
    %23 = sbr.rel (%p21) target = $region8
  $region5: #{full_transformer_encoder.8} parent=0 // loop_body
    %s25 = ssub.s32 %s20, 1
    %s26 = ssub.s32 %s20, 2
    %s36 = sadd.s32 1, %s29
    %p37 = scmp.ge.s32.totalorder %s36, 1
    %s38 = scalar_select %p37, 0, %s36
    %s39 = sadd.s32 1, %s28
    %s40 = scalar_select %p37, %s39, %s28
    %p41 = scmp.ge.s32.totalorder %s40, 1
    %s42 = scalar_select %p41, 0, %s40
    %s43 = sadd.s32 1, %s27
    %s44 = scalar_select %p41, %s43, %s27
    %p45 = scmp.ge.s32.totalorder %s44, 2
    %s46 = scalar_select %p45, 0, %s44
    %s47 = ssub.s32 %s27, %s46
    %s48 = ssub.s32 %s28, %s42
    %s49 = sor.u32 %s47, %s48
    %p50 = scmp.eq.s32.totalorder %s49, 0
    %s52 = sadd.s32 %s51, 1
    %s53 = scalar_select %p50, %s51, %s52
    %p56 = pneg %p50
    %p57 = scmp.eq.s32.totalorder %s20, 1
    %p58 = por %p56, %p57
    %p59 = scmp.ne.s32.totalorder %s51, %s54
    %p60 = scmp.eq.s32.totalorder %s20, 0
    %p61 = por %p59, %p60
    %p62 = scmp.ne.s32.totalorder %s51, %s54
    %p63 = scmp.eq.s32.totalorder %s25, 1
    %p64 = por %p62, %p63
    %p65 = scmp.ne.s32.totalorder %s54, %s55
    %p66 = scmp.eq.s32.totalorder %s25, 0
    %p67 = por %p65, %p66
    %p68 = scmp.ne.s32.totalorder %s54, %s55
    %p69 = scmp.eq.s32.totalorder %s26, 1
    %p70 = por %p68, %p69
    %p72 = scmp.ne.s32.totalorder %s55, %s71
    %p73 = scmp.eq.s32.totalorder %s26, 0
    %p74 = por %p72, %p73
    %s75 = ssub.s32 %s27, %s46
    %s76 = ssub.s32 %s29, %s38
    %s77 = sor.u32 %s75, %s76
    %p78 = scmp.eq.s32.totalorder %s77, 0
    %s80 = sadd.s32 %s79, 1
    %s81 = scalar_select %p78, %s79, %s80
    %p84 = pneg %p78
    %p85 = scmp.eq.s32.totalorder %s20, 1
    %p86 = por %p84, %p85
    %p87 = scmp.ne.s32.totalorder %s79, %s82
    %p88 = scmp.eq.s32.totalorder %s20, 0
    %p89 = por %p87, %p88
    %p90 = scmp.ne.s32.totalorder %s79, %s82
    %p91 = scmp.eq.s32.totalorder %s25, 1
    %p92 = por %p90, %p91
    %p93 = scmp.ne.s32.totalorder %s82, %s83
    %p94 = scmp.eq.s32.totalorder %s25, 0
    %p95 = por %p93, %p94
    %p96 = scmp.ne.s32.totalorder %s82, %s83
    %p97 = scmp.eq.s32.totalorder %s26, 1
    %p98 = por %p96, %p97
    %p100 = scmp.ne.s32.totalorder %s83, %s99
    %p101 = scmp.eq.s32.totalorder %s26, 0
    %p102 = por %p100, %p101
    %s103 = ssub.s32 %s27, %s46
    %s104 = ssub.s32 %s29, %s38
    %s105 = sor.u32 %s103, %s104
    %p106 = scmp.eq.s32.totalorder %s105, 0
    %s108 = sadd.s32 %s107, 1
    %s109 = scalar_select %p106, %s107, %s108
    %p112 = pneg %p106
    %p113 = scmp.eq.s32.totalorder %s20, 1
    %p114 = por %p112, %p113
    %p115 = scmp.ne.s32.totalorder %s107, %s110
    %p116 = scmp.eq.s32.totalorder %s20, 0
    %p117 = por %p115, %p116
    %p118 = scmp.ne.s32.totalorder %s107, %s110
    %p119 = scmp.eq.s32.totalorder %s25, 1
    %p120 = por %p118, %p119
    %p121 = scmp.ne.s32.totalorder %s110, %s111
    %p122 = scmp.eq.s32.totalorder %s25, 0
    %p123 = por %p121, %p122
    %p124 = scmp.ne.s32.totalorder %s110, %s111
    %p125 = scmp.eq.s32.totalorder %s26, 1
    %p126 = por %p124, %p125
    %p128 = scmp.ne.s32.totalorder %s111, %s127
    %p129 = scmp.eq.s32.totalorder %s26, 0
    %p130 = por %p128, %p129
    %s131 = ssub.s32 %s27, %s46
    %s132 = ssub.s32 %s28, %s42
    %s133 = sor.u32 %s131, %s132
    %p134 = scmp.eq.s32.totalorder %s133, 0
    %s136 = sadd.s32 %s135, 1
    %s137 = scalar_select %p134, %s135, %s136
    %p140 = pneg %p134
    %p141 = scmp.eq.s32.totalorder %s20, 1
    %p142 = por %p140, %p141
    %p143 = scmp.ne.s32.totalorder %s135, %s138
    %p144 = scmp.eq.s32.totalorder %s20, 0
    %p145 = por %p143, %p144
    %p146 = scmp.ne.s32.totalorder %s135, %s138
    %p147 = scmp.eq.s32.totalorder %s25, 1
    %p148 = por %p146, %p147
    %p149 = scmp.ne.s32.totalorder %s138, %s139
    %p150 = scmp.eq.s32.totalorder %s25, 0
    %p151 = por %p149, %p150
    %p152 = scmp.ne.s32.totalorder %s138, %s139
    %p153 = scmp.eq.s32.totalorder %s26, 1
    %p154 = por %p152, %p153
    %p156 = scmp.ne.s32.totalorder %s139, %s155
    %p157 = scmp.eq.s32.totalorder %s26, 0
    %p158 = por %p156, %p157
    %s160 = sadd.s32 %s159, 1
    %p163 = scmp.eq.s32.totalorder %s20, 1
    %p164 = scmp.ne.s32.totalorder %s159, %s161
    %p165 = scmp.eq.s32.totalorder %s20, 0
    %p166 = por %p164, %p165
    %p167 = scmp.ne.s32.totalorder %s159, %s161
    %p168 = scmp.eq.s32.totalorder %s25, 1
    %p169 = por %p167, %p168
    %p170 = scmp.ne.s32.totalorder %s161, %s162
    %p171 = scmp.eq.s32.totalorder %s25, 0
    %p172 = por %p170, %p171
    %p173 = scmp.ne.s32.totalorder %s161, %s162
    %p174 = scmp.eq.s32.totalorder %s26, 1
    %p175 = por %p173, %p174
    %p177 = scmp.ne.s32.totalorder %s162, %s176
    %p178 = scmp.eq.s32.totalorder %s26, 0
    %p179 = por %p177, %p178
    %s181 = sadd.s32 %s180, 1
    %p184 = scmp.eq.s32.totalorder %s20, 1
    %p185 = scmp.ne.s32.totalorder %s180, %s182
    %p186 = scmp.eq.s32.totalorder %s20, 0
    %p187 = por %p185, %p186
    %p188 = scmp.ne.s32.totalorder %s180, %s182
    %p189 = scmp.eq.s32.totalorder %s25, 1
    %p190 = por %p188, %p189
    %p191 = scmp.ne.s32.totalorder %s182, %s183
    %p192 = scmp.eq.s32.totalorder %s25, 0
    %p193 = por %p191, %p192
    %p194 = scmp.ne.s32.totalorder %s182, %s183
    %p195 = scmp.eq.s32.totalorder %s26, 1
    %p196 = por %p194, %p195
    %p198 = scmp.ne.s32.totalorder %s183, %s197
    %p199 = scmp.eq.s32.totalorder %s26, 0
    %p200 = por %p198, %p199
    %s202 = sadd.s32 %s201, 1
    %p205 = scmp.eq.s32.totalorder %s20, 1
    %p206 = scmp.ne.s32.totalorder %s201, %s203
    %p207 = scmp.eq.s32.totalorder %s20, 0
    %p208 = por %p206, %p207
    %p209 = scmp.ne.s32.totalorder %s201, %s203
    %p210 = scmp.eq.s32.totalorder %s25, 1
    %p211 = por %p209, %p210
    %p212 = scmp.ne.s32.totalorder %s203, %s204
    %p213 = scmp.eq.s32.totalorder %s25, 0
    %p214 = por %p212, %p213
    %p215 = scmp.ne.s32.totalorder %s203, %s204
    %p216 = scmp.eq.s32.totalorder %s26, 1
    %p217 = por %p215, %p216
    %p219 = scmp.ne.s32.totalorder %s204, %s218
    %p220 = scmp.eq.s32.totalorder %s26, 0
    %p221 = por %p219, %p220
    %s223 = sadd.s32 %s222, 1
    %p226 = scmp.eq.s32.totalorder %s20, 1
    %p227 = scmp.ne.s32.totalorder %s222, %s224
    %p228 = scmp.eq.s32.totalorder %s20, 0
    %p229 = por %p227, %p228
    %p230 = scmp.ne.s32.totalorder %s222, %s224
    %p231 = scmp.eq.s32.totalorder %s25, 1
    %p232 = por %p230, %p231
    %p233 = scmp.ne.s32.totalorder %s224, %s225
    %p234 = scmp.eq.s32.totalorder %s25, 0
    %p235 = por %p233, %p234
    %p236 = scmp.ne.s32.totalorder %s224, %s225
    %p237 = scmp.eq.s32.totalorder %s26, 1
    %p238 = por %p236, %p237
    %p240 = scmp.ne.s32.totalorder %s225, %s239
    %p241 = scmp.eq.s32.totalorder %s26, 0
    %p242 = por %p240, %p241
    %s244 = sadd.s32 %s243, 1
    %p247 = scmp.eq.s32.totalorder %s20, 1
    %p248 = scmp.ne.s32.totalorder %s243, %s245
    %p249 = scmp.eq.s32.totalorder %s20, 0
    %p250 = por %p248, %p249
    %p251 = scmp.ne.s32.totalorder %s243, %s245
    %p252 = scmp.eq.s32.totalorder %s25, 1
    %p253 = por %p251, %p252
    %p254 = scmp.ne.s32.totalorder %s245, %s246
    %p255 = scmp.eq.s32.totalorder %s25, 0
    %p256 = por %p254, %p255
    %p257 = scmp.ne.s32.totalorder %s245, %s246
    %p258 = scmp.eq.s32.totalorder %s26, 1
    %p259 = por %p257, %p258
    %p261 = scmp.ne.s32.totalorder %s246, %s260
    %p262 = scmp.eq.s32.totalorder %s26, 0
    %p263 = por %p261, %p262
    %s265 = sadd.s32 %s264, 1
    %p268 = scmp.eq.s32.totalorder %s20, 1
    %p269 = scmp.ne.s32.totalorder %s264, %s266
    %p270 = scmp.eq.s32.totalorder %s20, 0
    %p271 = por %p269, %p270
    %p272 = scmp.ne.s32.totalorder %s264, %s266
    %p273 = scmp.eq.s32.totalorder %s25, 1
    %p274 = por %p272, %p273
    %p275 = scmp.ne.s32.totalorder %s266, %s267
    %p276 = scmp.eq.s32.totalorder %s25, 0
    %p277 = por %p275, %p276
    %p278 = scmp.ne.s32.totalorder %s266, %s267
    %p279 = scmp.eq.s32.totalorder %s26, 1
    %p280 = por %p278, %p279
    %p282 = scmp.ne.s32.totalorder %s267, %s281
    %p283 = scmp.eq.s32.totalorder %s26, 0
    %p284 = por %p282, %p283
    %s286 = sadd.s32 %s285, 1
    %p289 = scmp.eq.s32.totalorder %s20, 1
    %p290 = scmp.ne.s32.totalorder %s285, %s287
    %p291 = scmp.eq.s32.totalorder %s20, 0
    %p292 = por %p290, %p291
    %p293 = scmp.ne.s32.totalorder %s285, %s287
    %p294 = scmp.eq.s32.totalorder %s25, 1
    %p295 = por %p293, %p294
    %p296 = scmp.ne.s32.totalorder %s287, %s288
    %p297 = scmp.eq.s32.totalorder %s25, 0
    %p298 = por %p296, %p297
    %p299 = scmp.ne.s32.totalorder %s287, %s288
    %p300 = scmp.eq.s32.totalorder %s26, 1
    %p301 = por %p299, %p300
    %p303 = scmp.ne.s32.totalorder %s288, %s302
    %p304 = scmp.eq.s32.totalorder %s26, 0
    %p305 = por %p303, %p304
    %s307 = sadd.s32 %s306, 1
    %p310 = scmp.eq.s32.totalorder %s20, 1
    %p311 = scmp.ne.s32.totalorder %s306, %s308
    %p312 = scmp.eq.s32.totalorder %s20, 0
    %p313 = por %p311, %p312
    %p314 = scmp.ne.s32.totalorder %s306, %s308
    %p315 = scmp.eq.s32.totalorder %s25, 1
    %p316 = por %p314, %p315
    %p317 = scmp.ne.s32.totalorder %s308, %s309
    %p318 = scmp.eq.s32.totalorder %s25, 0
    %p319 = por %p317, %p318
    %p320 = scmp.ne.s32.totalorder %s308, %s309
    %p321 = scmp.eq.s32.totalorder %s26, 1
    %p322 = por %p320, %p321
    %p324 = scmp.ne.s32.totalorder %s309, %s323
    %p325 = scmp.eq.s32.totalorder %s26, 0
    %p326 = por %p324, %p325
    %s328 = sadd.s32 %s327, 1
    %p331 = scmp.eq.s32.totalorder %s20, 1
    %p332 = scmp.ne.s32.totalorder %s327, %s329
    %p333 = scmp.eq.s32.totalorder %s20, 0
    %p334 = por %p332, %p333
    %p335 = scmp.ne.s32.totalorder %s327, %s329
    %p336 = scmp.eq.s32.totalorder %s25, 1
    %p337 = por %p335, %p336
    %p338 = scmp.ne.s32.totalorder %s329, %s330
    %p339 = scmp.eq.s32.totalorder %s25, 0
    %p340 = por %p338, %p339
    %p341 = scmp.ne.s32.totalorder %s329, %s330
    %p342 = scmp.eq.s32.totalorder %s26, 1
    %p343 = por %p341, %p342
    %p345 = scmp.ne.s32.totalorder %s330, %s344
    %p346 = scmp.eq.s32.totalorder %s26, 0
    %p347 = por %p345, %p346
    %s349 = sadd.s32 %s348, 1
    %p352 = scmp.eq.s32.totalorder %s20, 1
    %p353 = scmp.ne.s32.totalorder %s348, %s350
    %p354 = scmp.eq.s32.totalorder %s20, 0
    %p355 = por %p353, %p354
    %p356 = scmp.ne.s32.totalorder %s348, %s350
    %p357 = scmp.eq.s32.totalorder %s25, 1
    %p358 = por %p356, %p357
    %p359 = scmp.ne.s32.totalorder %s350, %s351
    %p360 = scmp.eq.s32.totalorder %s25, 0
    %p361 = por %p359, %p360
    %p362 = scmp.ne.s32.totalorder %s350, %s351
    %p363 = scmp.eq.s32.totalorder %s26, 1
    %p364 = por %p362, %p363
    %p366 = scmp.ne.s32.totalorder %s351, %s365
    %p367 = scmp.eq.s32.totalorder %s26, 0
    %p368 = por %p366, %p367
    %s369 = ssub.s32 %s27, %s46
    %s370 = ssub.s32 %s28, %s42
    %s371 = sor.u32 %s369, %s370
    %p372 = scmp.eq.s32.totalorder %s371, 0
    %s374 = sadd.s32 %s373, 1
    %s375 = scalar_select %p372, %s373, %s374
    %p378 = pneg %p372
    %p379 = scmp.eq.s32.totalorder %s20, 1
    %p380 = por %p378, %p379
    %p381 = scmp.ne.s32.totalorder %s373, %s376
    %p382 = scmp.eq.s32.totalorder %s20, 0
    %p383 = por %p381, %p382
    %p384 = scmp.ne.s32.totalorder %s373, %s376
    %p385 = scmp.eq.s32.totalorder %s25, 1
    %p386 = por %p384, %p385
    %p387 = scmp.ne.s32.totalorder %s376, %s377
    %p388 = scmp.eq.s32.totalorder %s25, 0
    %p389 = por %p387, %p388
    %p390 = scmp.ne.s32.totalorder %s376, %s377
    %p391 = scmp.eq.s32.totalorder %s26, 1
    %p392 = por %p390, %p391
    %p394 = scmp.ne.s32.totalorder %s377, %s393
    %p395 = scmp.eq.s32.totalorder %s26, 0
    %p396 = por %p394, %p395
    %p397 = scmp.le.s32.totalorder 1, %s20
    %p398 = scmp.lt.s32.totalorder %s20, 3
    %p399 = pnand %p397, %p398
    %p400 = pneg %p399
    // Predicated region
    $region9: #{full_transformer_encoder.8} parent=5 // pred_check
      _
    $region10: #{full_transformer_encoder.8} parent=5 // pred_check_branch
      %402 = sbr.rel (%p399) target = $region12
    $region11: #{full_transformer_encoder.8} parent=5 // pred_region
      %s403 = ssub.s32 %s20, 1
      // Predicated region
      $region13: #{full_transformer_encoder.8} parent=11 // pred_check
        %p404 = pneg %p172
      $region14: #{full_transformer_encoder.8} parent=11 // pred_check_branch
        %406 = sbr.rel (%p404) target = $region16
      $region15: #{full_transformer_encoder.8} parent=11 // pred_region
        _
      $region16: #{full_transformer_encoder.8} parent=11 // pred_fallthru
        _
      // Predicated region
      $region17: #{full_transformer_encoder.8} parent=11 // pred_check
        %p407 = pneg %p193
      $region18: #{full_transformer_encoder.8} parent=11 // pred_check_branch
        %409 = sbr.rel (%p407) target = $region20
      $region19: #{full_transformer_encoder.8} parent=11 // pred_region
        _
      $region20: #{full_transformer_encoder.8} parent=11 // pred_fallthru
        _
      // Predicated region
      $region21: #{full_transformer_encoder.8} parent=11 // pred_check
        %p410 = pneg %p214
      $region22: #{full_transformer_encoder.8} parent=11 // pred_check_branch
        %412 = sbr.rel (%p410) target = $region24
      $region23: #{full_transformer_encoder.8} parent=11 // pred_region
        _
      $region24: #{full_transformer_encoder.8} parent=11 // pred_fallthru
        _
      // Predicated region
      $region25: #{full_transformer_encoder.8} parent=11 // pred_check
        %p413 = pneg %p235
      $region26: #{full_transformer_encoder.8} parent=11 // pred_check_branch
        %415 = sbr.rel (%p413) target = $region28
      $region27: #{full_transformer_encoder.8} parent=11 // pred_region
        _
      $region28: #{full_transformer_encoder.8} parent=11 // pred_fallthru
        _
      // Predicated region
      $region29: #{full_transformer_encoder.8} parent=11 // pred_check
        %p416 = pneg %p256
      $region30: #{full_transformer_encoder.8} parent=11 // pred_check_branch
        %418 = sbr.rel (%p416) target = $region32
      $region31: #{full_transformer_encoder.8} parent=11 // pred_region
        _
      $region32: #{full_transformer_encoder.8} parent=11 // pred_fallthru
        _
      // Predicated region
      $region33: #{full_transformer_encoder.8} parent=11 // pred_check
        %p419 = pneg %p277
      $region34: #{full_transformer_encoder.8} parent=11 // pred_check_branch
        %421 = sbr.rel (%p419) target = $region36
      $region35: #{full_transformer_encoder.8} parent=11 // pred_region
        _
      $region36: #{full_transformer_encoder.8} parent=11 // pred_fallthru
        _
      // Predicated region
      $region37: #{full_transformer_encoder.8} parent=11 // pred_check
        %p422 = pneg %p298
      $region38: #{full_transformer_encoder.8} parent=11 // pred_check_branch
        %424 = sbr.rel (%p422) target = $region40
      $region39: #{full_transformer_encoder.8} parent=11 // pred_region
        _
      $region40: #{full_transformer_encoder.8} parent=11 // pred_fallthru
        _
      // Predicated region
      $region41: #{full_transformer_encoder.8} parent=11 // pred_check
        %p425 = pneg %p319
      $region42: #{full_transformer_encoder.8} parent=11 // pred_check_branch
        %427 = sbr.rel (%p425) target = $region44
      $region43: #{full_transformer_encoder.8} parent=11 // pred_region
        _
      $region44: #{full_transformer_encoder.8} parent=11 // pred_fallthru
        _
      // Predicated region
      $region45: #{full_transformer_encoder.8} parent=11 // pred_check
        %p428 = pneg %p340
      $region46: #{full_transformer_encoder.8} parent=11 // pred_check_branch
        %430 = sbr.rel (%p428) target = $region48
      $region47: #{full_transformer_encoder.8} parent=11 // pred_region
        _
      $region48: #{full_transformer_encoder.8} parent=11 // pred_fallthru
        _
      // Predicated region
      $region49: #{full_transformer_encoder.8} parent=11 // pred_check
        %p431 = pneg %p361
      $region50: #{full_transformer_encoder.8} parent=11 // pred_check_branch
        %433 = sbr.rel (%p431) target = $region52
      $region51: #{full_transformer_encoder.8} parent=11 // pred_region
        _
      $region52: #{full_transformer_encoder.8} parent=11 // pred_fallthru
        _
    $region12: #{full_transformer_encoder.8} parent=5 // pred_fallthru
      _
    %p434 = scmp.lt.s32.totalorder %s20, 2
    // Predicated region
    $region53: #{full_transformer_encoder.8} parent=5 // pred_check
      %p435 = pneg %p434
    $region54: #{full_transformer_encoder.8} parent=5 // pred_check_branch
      %437 = sbr.rel (%p435) target = $region56
    $region55: #{full_transformer_encoder.8} parent=5 // pred_region
      // Predicated region
      $region57: #{full_transformer_encoder.8} parent=55 // pred_check
        %p438 = pneg %p61
      $region58: #{full_transformer_encoder.8} parent=55 // pred_check_branch
        %440 = sbr.rel (%p438) target = $region60
      $region59: #{full_transformer_encoder.8} parent=55 // pred_region
        %p441 = scmp.lt.s32.totalorder %s27, 1
        %s442 = scalar_select %p441, %s27, 1
        %p443 = scmp.lt.s32.totalorder %s28, 0
        %s444 = scalar_select %p443, %s28, 0
        %s445 = sadd.s32 %s444, %s442
        %s446 = smul.addr %s445, 4
        %s447 = scalar_lea.vmem %s0, %s446
      $region60: #{full_transformer_encoder.8} parent=55 // pred_fallthru
        _
      // Predicated region
      $region61: #{full_transformer_encoder.8} parent=55 // pred_check
        %p448 = pneg %p89
      $region62: #{full_transformer_encoder.8} parent=55 // pred_check_branch
        %450 = sbr.rel (%p448) target = $region64
      $region63: #{full_transformer_encoder.8} parent=55 // pred_region
        %p451 = scmp.lt.s32.totalorder %s27, 1
        %s452 = scalar_select %p451, %s27, 1
        %p453 = scmp.lt.s32.totalorder %s29, 0
        %s454 = scalar_select %p453, %s29, 0
        %s455 = sadd.s32 %s454, %s452
        %s456 = smul.addr %s455, 4
        %s457 = scalar_lea.vmem %s1, %s456
      $region64: #{full_transformer_encoder.8} parent=55 // pred_fallthru
        _
      // Predicated region
      $region65: #{full_transformer_encoder.8} parent=55 // pred_check
        %p458 = pneg %p117
      $region66: #{full_transformer_encoder.8} parent=55 // pred_check_branch
        %460 = sbr.rel (%p458) target = $region68
      $region67: #{full_transformer_encoder.8} parent=55 // pred_region
        %p461 = scmp.lt.s32.totalorder %s27, 1
        %s462 = scalar_select %p461, %s27, 1
        %p463 = scmp.lt.s32.totalorder %s29, 0
        %s464 = scalar_select %p463, %s29, 0
        %s465 = sadd.s32 %s464, %s462
        %s466 = smul.addr %s465, 4
        %s467 = scalar_lea.vmem %s2, %s466
      $region68: #{full_transformer_encoder.8} parent=55 // pred_fallthru
        _
      // Predicated region
      $region69: #{full_transformer_encoder.8} parent=55 // pred_check
        %p468 = pneg %p145
      $region70: #{full_transformer_encoder.8} parent=55 // pred_check_branch
        %470 = sbr.rel (%p468) target = $region72
      $region71: #{full_transformer_encoder.8} parent=55 // pred_region
        %p471 = scmp.lt.s32.totalorder %s27, 1
        %s472 = scalar_select %p471, %s27, 1
        %p473 = scmp.lt.s32.totalorder %s28, 0
        %s474 = scalar_select %p473, %s28, 0
        %s475 = sadd.s32 %s474, %s472
        %s476 = smul.addr %s475, 8
        %s477 = scalar_lea.vmem %s3, %s476
      $region72: #{full_transformer_encoder.8} parent=55 // pred_fallthru
        _
    $region56: #{full_transformer_encoder.8} parent=5 // pred_fallthru
      _
    %p478 = scmp.le.s32.totalorder 1, %s20
    %p479 = scmp.lt.s32.totalorder %s20, 3
    %p480 = pnand %p478, %p479
    %p481 = pneg %p480
    // Predicated region
    $region73: #{full_transformer_encoder.8} parent=5 // pred_check
      _
    $region74: #{full_transformer_encoder.8} parent=5 // pred_check_branch
      %483 = sbr.rel (%p480) target = $region76
    $region75: #{full_transformer_encoder.8} parent=5 // pred_region
      %s484 = ssub.s32 %s20, 1
      %p485 = scmp.lt.s32.totalorder %s30, 1
      %s486 = scalar_select %p485, %s30, 1
      %p487 = scmp.lt.s32.totalorder %s31, 0
      %s488 = scalar_select %p487, %s31, 0
      %s489 = sadd.s32 %s488, %s486
      %s490 = smul.addr %s489, 4
      %s491 = scalar_lea.vmem %s0, %s490
      %p492 = pneg %p67
      %p493 = pneg %p64
      %p494 = scmp.lt.s32.totalorder %s30, 1
      %s495 = scalar_select %p494, %s30, 1
      %p496 = scmp.lt.s32.totalorder %s32, 0
      %s497 = scalar_select %p496, %s32, 0
      %s498 = sadd.s32 %s497, %s495
      %s499 = smul.addr %s498, 4
      %s500 = scalar_lea.vmem %s1, %s499
      %p501 = pneg %p95
      %p502 = pneg %p92
      %p503 = scmp.lt.s32.totalorder %s30, 1
      %s504 = scalar_select %p503, %s30, 1
      %p505 = scmp.lt.s32.totalorder %s32, 0
      %s506 = scalar_select %p505, %s32, 0
      %s507 = sadd.s32 %s506, %s504
      %s508 = smul.addr %s507, 4
      %s509 = scalar_lea.vmem %s2, %s508
      %p510 = pneg %p123
      %p511 = pneg %p120
      %p512 = scmp.lt.s32.totalorder %s30, 1
      %s513 = scalar_select %p512, %s30, 1
      %p514 = scmp.lt.s32.totalorder %s31, 0
      %s515 = scalar_select %p514, %s31, 0
      %s516 = sadd.s32 %s515, %s513
      %s517 = smul.addr %s516, 8
      %s518 = scalar_lea.vmem %s3, %s517
      %p519 = pneg %p151
      %p520 = pneg %p148
      %p521 = pneg %p172
      %p522 = pneg %p169
      %p523 = pneg %p193
      %p524 = pneg %p190
      %p525 = pneg %p214
      %p526 = pneg %p211
      %p527 = pneg %p235
      %p528 = pneg %p232
      %p529 = pneg %p256
      %p530 = pneg %p253
      %p531 = pneg %p277
      %p532 = pneg %p274
      %p533 = pneg %p298
      %p534 = pneg %p295
      %p535 = pneg %p319
      %p536 = pneg %p316
      %p537 = pneg %p340
      %p538 = pneg %p337
      %p539 = pneg %p361
      %p540 = pneg %p358
      %p541 = pneg %p389
      %p542 = pneg %p386
      %p543 = scmp.lt.s32.totalorder %s30, 1
      %s544 = scalar_select %p543, %s30, 1
      %p545 = scmp.lt.s32.totalorder %s31, 0
      %s546 = scalar_select %p545, %s31, 0
      %s547 = sadd.s32 %s546, %s544
      %s548 = smul.addr %s547, 8
      %s549 = scalar_lea.vmem %s14, %s548
      %p550 = scmp.lt.s32.totalorder %s30, 1
      %s551 = scalar_select %p550, %s30, 1
      %p552 = scmp.lt.s32.totalorder %s31, 0
      %s553 = scalar_select %p552, %s31, 0
      %s554 = sadd.s32 %s553, %s551
      %s555 = smul.addr %s554, 4
      %s556 = scalar_lea.vmem %s0, %s555
      %p557 = scmp.lt.s32.totalorder %s30, 1
      %s558 = scalar_select %p557, %s30, 1
      %p559 = scmp.lt.s32.totalorder %s32, 0
      %s560 = scalar_select %p559, %s32, 0
      %s561 = sadd.s32 %s560, %s558
      %s562 = smul.addr %s561, 4
      %s563 = scalar_lea.vmem %s1, %s562
      %p564 = scmp.lt.s32.totalorder %s30, 1
      %s565 = scalar_select %p564, %s30, 1
      %p566 = scmp.lt.s32.totalorder %s32, 0
      %s567 = scalar_select %p566, %s32, 0
      %s568 = sadd.s32 %s567, %s565
      %s569 = smul.addr %s568, 4
      %s570 = scalar_lea.vmem %s2, %s569
      %p571 = scmp.lt.s32.totalorder %s30, 1
      %s572 = scalar_select %p571, %s30, 1
      %p573 = scmp.lt.s32.totalorder %s31, 0
      %s574 = scalar_select %p573, %s31, 0
      %s575 = sadd.s32 %s574, %s572
      %s576 = smul.addr %s575, 8
      %s577 = scalar_lea.vmem %s3, %s576
      %p578 = scmp.lt.s32.totalorder %s30, 1
      %s579 = scalar_select %p578, %s30, 1
      %p580 = scmp.lt.s32.totalorder %s31, 0
      %s581 = scalar_select %p580, %s31, 0
      %s582 = sadd.s32 %s581, %s579
      %s583 = smul.addr %s582, 8
      %s584 = scalar_lea.vmem %s14, %s583
      %p586 = scmp.eq.s32.totalorder %s32, 0
      // Predicated region
      $region77: #{full_transformer_encoder.8} parent=75 // pred_check
        %p587 = pneg %p586
      $region78: #{full_transformer_encoder.8} parent=75 // pred_check_branch
        %589 = sbr.rel (%p587) target = $region80
      $region79: #{full_transformer_encoder.8} parent=75 // pred_region
        %vm590 = vcmask 7168
        %591 = vst.msk [vmem:[#allocation2] sm:$0xff] %vm590, -inf
        %592 = vst.msk [vmem:[#allocation2 + $0x8] sm:$0xff] %vm590, -inf
        %593 = vst.msk [vmem:[#allocation3] sm:$0xff] %vm590, 0.0
        %594 = vst.msk [vmem:[#allocation3 + $0x8] sm:$0xff] %vm590, 0.0
        %vm595 = vcmask 130048
        %596 = vst.msk [vmem:[#allocation4] sm:$0xff] %vm595, 0.0
        %597 = vst.msk [vmem:[#allocation4 + $0x8] sm:$0xff] %vm595, 0.0
      $region80: #{full_transformer_encoder.8} parent=75 // pred_fallthru
        _
      %v598 = vld [vmem:[%s556] sm:$0xf]
      %v599 = vld [vmem:[%s563] sm:$0xf]
      %v600 = vld [vmem:[%s570] sm:$0xf]
      %vm601 = vcmask 130048
      %v603 = vsel %vm601, %v598, 0
      %v606 = vsel %vm601, %v599, 0
      %608 = vmatprep.subr.bf16.mxu0 0
      %609 = vmatpush1.bf16.xpose.msra.mxu0 %v606
      %610 = vmatprep.subr.bf16.mxu0 0
      %611 = vmatpush1.bf16.xpose.msra.mxu0 0
      %612 = vmatprep.subr.bf16.mxu0 0
      %613 = vmatpush1.bf16.xpose.msra.mxu0 0
      %614 = vmatprep.subr.bf16.mxu0 0
      %615 = vmatpush1.bf16.xpose.msra.mxu0 0
      %616 = vmatprep.subr.bf16.mxu0 0
      %617 = vmatpush1.bf16.xpose.msra.mxu0 0
      %618 = vmatprep.subr.bf16.mxu0 0
      %619 = vmatpush1.bf16.xpose.msra.mxu0 0
      %620 = vmatprep.subr.bf16.mxu0 0
      %621 = vmatpush1.bf16.xpose.msra.mxu0 0
      %622 = vmatprep.subr.bf16.mxu0 0
      %623 = vmatpush1.bf16.xpose.msra.mxu0 0
      %624 = vmatprep.subr.bf16.mxu0 0
      %625 = vmatpush1.bf16.xpose.msra.mxu0 0
      %626 = vmatprep.subr.bf16.mxu0 0
      %627 = vmatpush1.bf16.xpose.msra.mxu0 0
      %628 = vmatprep.subr.bf16.mxu0 0
      %629 = vmatpush1.bf16.xpose.msra.mxu0 0
      %630 = vmatprep.subr.bf16.mxu0 0
      %631 = vmatpush1.bf16.xpose.msra.mxu0 0
      %632 = vmatprep.subr.bf16.mxu0 0
      %633 = vmatpush1.bf16.xpose.msra.mxu0 0
      %634 = vmatprep.subr.bf16.mxu0 0
      %635 = vmatpush1.bf16.xpose.msra.mxu0 0
      %636 = vmatprep.subr.bf16.mxu0 0
      %637 = vmatpush1.bf16.xpose.msra.mxu0 0
      %638 = vmatprep.subr.bf16.mxu0 0
      %639 = vmatpush1.bf16.xpose.msra.mxu0 0
      %640 = vmatprep.mubr.bf16.mxu0 0
      %641 = vmatmul.mubr.bf16.gmra.mrb[0].mxu0 %v603
      %v642 = vpop.f32.mrb[0].mxu0
      %v643 = vadd.f32 0.0, %v642
      %v644 = vpop.f32.mrb[0].mxu0
      %v645 = vpop.f32.mrb[0].mxu0
      %v646 = vpop.f32.mrb[0].mxu0
      %647 = vdwg.mxu0
      %v648 = vmul.f32 %v643, 0.25
      %v649 = vld [vmem:[#allocation2] sm:$0xff]
      %vm650 = vcmask 64512
      %v651 = vsel %vm650, %v648, -inf
      %652 = vmax.xlane.f32.xlu0 %v651
      %v653 = vpop.xlane.xlu0 %652
      %v654 = vmax.f32 %v649, %v653
      %v655 = vsub.f32 %v649, %v654
      %v656 = vmul.f32 %v655, 1.442695
      %v657 = vpow.pop %v656
      %659 = vset.pattern.permute.xlu0 0
      %660 = vperm.xlu0 %659, %v654
      %v661 = vpop.permute.xlu0 %660
      %v663 = vsub.f32 %v648, %v661
      %v664 = vmul.f32 %v663, 1.442695
      %v665 = vpow.pop %v664
      %v666 = vld [vmem:[#allocation3] sm:$0xff]
      %v667 = vmul.f32 %v657, %v666
      %v668 = vsel %vm650, %v665, 0.0
      %669 = vadd.xlane.f32.xlu0 %v668
      %v670 = vpop.xlane.xlu0 %669
      %v671 = vadd.f32 %v667, %v670
      %vm672 = vcmask 7168
      %673 = vst.msk [vmem:[#allocation3] sm:$0xff] %vm672, %v671
      %v674 = vld [vmem:[#allocation4] sm:$0xff]
      %676 = vset.pattern.permute.xlu0 0
      %677 = vperm.xlu0 %676, %v657
      %v678 = vpop.permute.xlu0 %677
      %v680 = vmul.f32 %v678, %v674
      %v681 = vpack.c.bf16 %v665, %v665
      %v683 = vsel %vm650, %v681, 0
      %vm685 = vcmask 1043456
      %v687 = vsel %vm685, %v600, 0
      %689 = vmatprep.subr.bf16.mxu0 0
      %690 = vmatpush1.bf16.msra.mxu0 %v687
      %691 = vmatprep.subr.bf16.mxu0 0
      %692 = vmatpush1.bf16.msra.mxu0 0
      %693 = vmatprep.subr.bf16.mxu0 0
      %694 = vmatpush1.bf16.msra.mxu0 0
      %695 = vmatprep.subr.bf16.mxu0 0
      %696 = vmatpush1.bf16.msra.mxu0 0
      %697 = vmatprep.subr.bf16.mxu0 0
      %698 = vmatpush1.bf16.msra.mxu0 0
      %699 = vmatprep.subr.bf16.mxu0 0
      %700 = vmatpush1.bf16.msra.mxu0 0
      %701 = vmatprep.subr.bf16.mxu0 0
      %702 = vmatpush1.bf16.msra.mxu0 0
      %703 = vmatprep.subr.bf16.mxu0 0
      %704 = vmatpush1.bf16.msra.mxu0 0
      %705 = vmatprep.subr.bf16.mxu0 0
      %706 = vmatpush1.bf16.msra.mxu0 0
      %707 = vmatprep.subr.bf16.mxu0 0
      %708 = vmatpush1.bf16.msra.mxu0 0
      %709 = vmatprep.subr.bf16.mxu0 0
      %710 = vmatpush1.bf16.msra.mxu0 0
      %711 = vmatprep.subr.bf16.mxu0 0
      %712 = vmatpush1.bf16.msra.mxu0 0
      %713 = vmatprep.subr.bf16.mxu0 0
      %714 = vmatpush1.bf16.msra.mxu0 0
      %715 = vmatprep.subr.bf16.mxu0 0
      %716 = vmatpush1.bf16.msra.mxu0 0
      %717 = vmatprep.subr.bf16.mxu0 0
      %718 = vmatpush1.bf16.msra.mxu0 0
      %719 = vmatprep.subr.bf16.mxu0 0
      %720 = vmatpush1.bf16.msra.mxu0 0
      %721 = vmatprep.mubr.bf16.mxu0 0
      %722 = vmatmul.mubr.bf16.gmra.mrb[0].mxu0 %v683
      %v723 = vpop.f32.mrb[0].mxu0
      %v724 = vadd.f32 0.0, %v723
      %v725 = vpop.f32.mrb[0].mxu0
      %v726 = vpop.f32.mrb[0].mxu0
      %v727 = vpop.f32.mrb[0].mxu0
      %728 = vdwg.mxu0
      %v729 = vadd.f32 %v680, %v724
      %730 = vst.msk [vmem:[#allocation4] sm:$0xff] %vm601, %v729
      %731 = vst.msk [vmem:[#allocation2] sm:$0xff] %vm672, %v654
      %v733 = vunpack.c.l.b16 %v598
      %v734 = vpack.c.b16 %v733, %v733
      %735 = vrot.lane.b32.xlu0 %v734, 112
      %v736 = vpop.permute.xlu0 %735
      %v738 = vunpack.c.l.b16 %v599
      %v739 = vpack.c.b16 %v738, %v738
      %740 = vrot.lane.b32.xlu0 %v739, 112
      %v741 = vpop.permute.xlu0 %740
      %v743 = vsel %vm601, %v736, 0
      %v746 = vsel %vm601, %v741, 0
      %748 = vmatprep.subr.bf16.mxu0 0
      %749 = vmatpush1.bf16.xpose.msra.mxu0 %v746
      %750 = vmatprep.subr.bf16.mxu0 0
      %751 = vmatpush1.bf16.xpose.msra.mxu0 0
      %752 = vmatprep.subr.bf16.mxu0 0
      %753 = vmatpush1.bf16.xpose.msra.mxu0 0
      %754 = vmatprep.subr.bf16.mxu0 0
      %755 = vmatpush1.bf16.xpose.msra.mxu0 0
      %756 = vmatprep.subr.bf16.mxu0 0
      %757 = vmatpush1.bf16.xpose.msra.mxu0 0
      %758 = vmatprep.subr.bf16.mxu0 0
      %759 = vmatpush1.bf16.xpose.msra.mxu0 0
      %760 = vmatprep.subr.bf16.mxu0 0
      %761 = vmatpush1.bf16.xpose.msra.mxu0 0
      %762 = vmatprep.subr.bf16.mxu0 0
      %763 = vmatpush1.bf16.xpose.msra.mxu0 0
      %764 = vmatprep.subr.bf16.mxu0 0
      %765 = vmatpush1.bf16.xpose.msra.mxu0 0
      %766 = vmatprep.subr.bf16.mxu0 0
      %767 = vmatpush1.bf16.xpose.msra.mxu0 0
      %768 = vmatprep.subr.bf16.mxu0 0
      %769 = vmatpush1.bf16.xpose.msra.mxu0 0
      %770 = vmatprep.subr.bf16.mxu0 0
      %771 = vmatpush1.bf16.xpose.msra.mxu0 0
      %772 = vmatprep.subr.bf16.mxu0 0
      %773 = vmatpush1.bf16.xpose.msra.mxu0 0
      %774 = vmatprep.subr.bf16.mxu0 0
      %775 = vmatpush1.bf16.xpose.msra.mxu0 0
      %776 = vmatprep.subr.bf16.mxu0 0
      %777 = vmatpush1.bf16.xpose.msra.mxu0 0
      %778 = vmatprep.subr.bf16.mxu0 0
      %779 = vmatpush1.bf16.xpose.msra.mxu0 0
      %780 = vmatprep.mubr.bf16.mxu0 0
      %781 = vmatmul.mubr.bf16.gmra.mrb[0].mxu0 %v743
      %v782 = vpop.f32.mrb[0].mxu0
      %v783 = vadd.f32 0.0, %v782
      %v784 = vpop.f32.mrb[0].mxu0
      %v785 = vpop.f32.mrb[0].mxu0
      %v786 = vpop.f32.mrb[0].mxu0
      %787 = vdwg.mxu0
      %v788 = vmul.f32 %v783, 0.25
      %s789 = scalar_lea.vmem [#allocation2], 8
      %v790 = vld [vmem:[%s789] sm:$0xff]
      %v791 = vsel %vm650, %v788, -inf
      %792 = vmax.xlane.f32.xlu0 %v791
      %v793 = vpop.xlane.xlu0 %792
      %v794 = vmax.f32 %v790, %v793
      %v795 = vsub.f32 %v790, %v794
      %v796 = vmul.f32 %v795, 1.442695
      %v797 = vpow.pop %v796
      %799 = vset.pattern.permute.xlu0 0
      %800 = vperm.xlu0 %799, %v794
      %v801 = vpop.permute.xlu0 %800
      %v803 = vsub.f32 %v788, %v801
      %v804 = vmul.f32 %v803, 1.442695
      %v805 = vpow.pop %v804
      %s806 = scalar_lea.vmem [#allocation3], 8
      %v807 = vld [vmem:[%s806] sm:$0xff]
      %v808 = vmul.f32 %v797, %v807
      %v809 = vsel %vm650, %v805, 0.0
      %810 = vadd.xlane.f32.xlu0 %v809
      %v811 = vpop.xlane.xlu0 %810
      %v812 = vadd.f32 %v808, %v811
      %813 = vst.msk [vmem:[%s806] sm:$0xff] %vm672, %v812
      %s814 = scalar_lea.vmem [#allocation4], 8
      %v815 = vld [vmem:[%s814] sm:$0xff]
      %817 = vset.pattern.permute.xlu0 0
      %818 = vperm.xlu0 %817, %v797
      %v819 = vpop.permute.xlu0 %818
      %v821 = vmul.f32 %v819, %v815
      %v822 = vpack.c.bf16 %v805, %v805
      %v824 = vunpack.c.l.b16 %v600
      %v825 = vpack.c.b16 %v824, %v824
      %826 = vrot.lane.b32.xlu0 %v825, 112
      %v827 = vpop.permute.xlu0 %826
      %v829 = vsel %vm650, %v822, 0
      %v832 = vsel %vm685, %v827, 0
      %834 = vmatprep.subr.bf16.mxu0 0
      %835 = vmatpush1.bf16.msra.mxu0 %v832
      %836 = vmatprep.subr.bf16.mxu0 0
      %837 = vmatpush1.bf16.msra.mxu0 0
      %838 = vmatprep.subr.bf16.mxu0 0
      %839 = vmatpush1.bf16.msra.mxu0 0
      %840 = vmatprep.subr.bf16.mxu0 0
      %841 = vmatpush1.bf16.msra.mxu0 0
      %842 = vmatprep.subr.bf16.mxu0 0
      %843 = vmatpush1.bf16.msra.mxu0 0
      %844 = vmatprep.subr.bf16.mxu0 0
      %845 = vmatpush1.bf16.msra.mxu0 0
      %846 = vmatprep.subr.bf16.mxu0 0
      %847 = vmatpush1.bf16.msra.mxu0 0
      %848 = vmatprep.subr.bf16.mxu0 0
      %849 = vmatpush1.bf16.msra.mxu0 0
      %850 = vmatprep.subr.bf16.mxu0 0
      %851 = vmatpush1.bf16.msra.mxu0 0
      %852 = vmatprep.subr.bf16.mxu0 0
      %853 = vmatpush1.bf16.msra.mxu0 0
      %854 = vmatprep.subr.bf16.mxu0 0
      %855 = vmatpush1.bf16.msra.mxu0 0
      %856 = vmatprep.subr.bf16.mxu0 0
      %857 = vmatpush1.bf16.msra.mxu0 0
      %858 = vmatprep.subr.bf16.mxu0 0
      %859 = vmatpush1.bf16.msra.mxu0 0
      %860 = vmatprep.subr.bf16.mxu0 0
      %861 = vmatpush1.bf16.msra.mxu0 0
      %862 = vmatprep.subr.bf16.mxu0 0
      %863 = vmatpush1.bf16.msra.mxu0 0
      %864 = vmatprep.subr.bf16.mxu0 0
      %865 = vmatpush1.bf16.msra.mxu0 0
      %866 = vmatprep.mubr.bf16.mxu0 0
      %867 = vmatmul.mubr.bf16.gmra.mrb[0].mxu0 %v829
      %v868 = vpop.f32.mrb[0].mxu0
      %v869 = vadd.f32 0.0, %v868
      %v870 = vpop.f32.mrb[0].mxu0
      %v871 = vpop.f32.mrb[0].mxu0
      %v872 = vpop.f32.mrb[0].mxu0
      %873 = vdwg.mxu0
      %v874 = vadd.f32 %v821, %v869
      %875 = vst.msk [vmem:[%s814] sm:$0xff] %vm601, %v874
      %876 = vst.msk [vmem:[%s789] sm:$0xff] %vm672, %v794
      // Predicated region
      $region81: #{full_transformer_encoder.8} parent=75 // pred_check
        %p877 = pneg %p586
      $region82: #{full_transformer_encoder.8} parent=75 // pred_check_branch
        %879 = sbr.rel (%p877) target = $region84
      $region83: #{full_transformer_encoder.8} parent=75 // pred_region
        %v880 = vld [vmem:[%s5] sm:$0x1]
        %v881 = vld [vmem:[#allocation4] sm:$0xff]
        %v882 = vld [vmem:[#allocation3] sm:$0xff]
        %v883 = vrcp.pop %v882
        %885 = vset.pattern.permute.xlu0 0
        %886 = vperm.xlu0 %885, %v883
        %v887 = vpop.permute.xlu0 %886
        %v889 = vmul.f32 %v881, %v887
        %v890 = vpack.c.bf16 %v889, %v889
        %v891 = vld [vmem:[%s4] sm:$0xf]
        %v892 = vld [vmem:[%s4 + $0x4] sm:$0xf]
        %v895 = vunpack.c.l.b16 %v891
        %v896 = vunpack.c.l.b16 %v892
        %v897 = vpack.c.b16 %v896, %v895
        %v900 = vsel %vm601, %v890, 0
        %902 = vmatprep.subr.bf16.mxu0 0
        %903 = vmatpush1.bf16.msra.mxu0 %v897
        %904 = vmatprep.subr.bf16.mxu0 0
        %905 = vmatpush1.bf16.msra.mxu0 0
        %906 = vmatprep.subr.bf16.mxu0 0
        %907 = vmatpush1.bf16.msra.mxu0 0
        %908 = vmatprep.subr.bf16.mxu0 0
        %909 = vmatpush1.bf16.msra.mxu0 0
        %910 = vmatprep.subr.bf16.mxu0 0
        %911 = vmatpush1.bf16.msra.mxu0 0
        %912 = vmatprep.subr.bf16.mxu0 0
        %913 = vmatpush1.bf16.msra.mxu0 0
        %914 = vmatprep.subr.bf16.mxu0 0
        %915 = vmatpush1.bf16.msra.mxu0 0
        %916 = vmatprep.subr.bf16.mxu0 0
        %917 = vmatpush1.bf16.msra.mxu0 0
        %918 = vmatprep.subr.bf16.mxu0 0
        %919 = vmatpush1.bf16.msra.mxu0 0
        %920 = vmatprep.subr.bf16.mxu0 0
        %921 = vmatpush1.bf16.msra.mxu0 0
        %922 = vmatprep.subr.bf16.mxu0 0
        %923 = vmatpush1.bf16.msra.mxu0 0
        %924 = vmatprep.subr.bf16.mxu0 0
        %925 = vmatpush1.bf16.msra.mxu0 0
        %926 = vmatprep.subr.bf16.mxu0 0
        %927 = vmatpush1.bf16.msra.mxu0 0
        %928 = vmatprep.subr.bf16.mxu0 0
        %929 = vmatpush1.bf16.msra.mxu0 0
        %930 = vmatprep.subr.bf16.mxu0 0
        %931 = vmatpush1.bf16.msra.mxu0 0
        %932 = vmatprep.subr.bf16.mxu0 0
        %933 = vmatpush1.bf16.msra.mxu0 0
        %934 = vmatprep.mubr.bf16.mxu0 0
        %935 = vmatmul.mubr.bf16.gmra.mrb[0].mxu0 %v900
        %v936 = vpop.f32.mrb[0].mxu0
        %v937 = vadd.f32 0.0, %v936
        %v938 = vpop.f32.mrb[0].mxu0
        %v939 = vpop.f32.mrb[0].mxu0
        %v940 = vpop.f32.mrb[0].mxu0
        %941 = vdwg.mxu0
        %v943 = vlaneseq
        %v944 = vshrl.u32 %v943, 7
        %v945 = vsub.s32 0, %v944
        %v946 = vrot.slane %v880, %v945
        %v948 = vadd.f32 %v946, %v937
        %v949 = vld [vmem:[%s814] sm:$0xff]
        %v950 = vld [vmem:[%s806] sm:$0xff]
        %v951 = vrcp.pop %v950
        %953 = vset.pattern.permute.xlu0 0
        %954 = vperm.xlu0 %953, %v951
        %v955 = vpop.permute.xlu0 %954
        %v957 = vmul.f32 %v949, %v955
        %v958 = vpack.c.bf16 %v957, %v957
        %v959 = vld [vmem:[%s4 + $0x8] sm:$0xf]
        %v960 = vld [vmem:[%s4 + $0xc] sm:$0xf]
        %v963 = vunpack.c.l.b16 %v959
        %v964 = vunpack.c.l.b16 %v960
        %v965 = vpack.c.b16 %v964, %v963
        %v968 = vsel %vm601, %v958, 0
        %970 = vmatprep.subr.bf16.mxu0 0
        %971 = vmatpush1.bf16.msra.mxu0 %v965
        %972 = vmatprep.subr.bf16.mxu0 0
        %973 = vmatpush1.bf16.msra.mxu0 0
        %974 = vmatprep.subr.bf16.mxu0 0
        %975 = vmatpush1.bf16.msra.mxu0 0
        %976 = vmatprep.subr.bf16.mxu0 0
        %977 = vmatpush1.bf16.msra.mxu0 0
        %978 = vmatprep.subr.bf16.mxu0 0
        %979 = vmatpush1.bf16.msra.mxu0 0
        %980 = vmatprep.subr.bf16.mxu0 0
        %981 = vmatpush1.bf16.msra.mxu0 0
        %982 = vmatprep.subr.bf16.mxu0 0
        %983 = vmatpush1.bf16.msra.mxu0 0
        %984 = vmatprep.subr.bf16.mxu0 0
        %985 = vmatpush1.bf16.msra.mxu0 0
        %986 = vmatprep.subr.bf16.mxu0 0
        %987 = vmatpush1.bf16.msra.mxu0 0
        %988 = vmatprep.subr.bf16.mxu0 0
        %989 = vmatpush1.bf16.msra.mxu0 0
        %990 = vmatprep.subr.bf16.mxu0 0
        %991 = vmatpush1.bf16.msra.mxu0 0
        %992 = vmatprep.subr.bf16.mxu0 0
        %993 = vmatpush1.bf16.msra.mxu0 0
        %994 = vmatprep.subr.bf16.mxu0 0
        %995 = vmatpush1.bf16.msra.mxu0 0
        %996 = vmatprep.subr.bf16.mxu0 0
        %997 = vmatpush1.bf16.msra.mxu0 0
        %998 = vmatprep.subr.bf16.mxu0 0
        %999 = vmatpush1.bf16.msra.mxu0 0
        %1000 = vmatprep.subr.bf16.mxu0 0
        %1001 = vmatpush1.bf16.msra.mxu0 0
        %1002 = vmatprep.mubr.bf16.mxu0 0
        %1003 = vmatmul.mubr.bf16.gmra.mrb[0].mxu0 %v968
        %v1004 = vpop.f32.mrb[0].mxu0
        %v1005 = vadd.f32 0.0, %v1004
        %v1006 = vpop.f32.mrb[0].mxu0
        %v1007 = vpop.f32.mrb[0].mxu0
        %v1008 = vpop.f32.mrb[0].mxu0
        %1009 = vdwg.mxu0
        %v1010 = vadd.f32 %v948, %v1005
        %v1011 = vld [vmem:[%s6] sm:$0x1]
        %v1012 = vld [vmem:[%s7] sm:$0x1]
        %vm1013 = vcmask 261120
        %v1014 = vsel %vm1013, %v1010, 0.0
        %1015 = vadd.xlane.f32.xlu0 %v1014
        %v1016 = vpop.xlane.xlu0 %1015
        %v1017 = vrcp.pop 32.0
        %v1018 = vmul.f32 %v1016, %v1017
        %v1019 = vsub.f32 %v1010, %v1018
        %v1020 = vmul.f32 %v1019, %v1019
        %v1021 = vsel %vm1013, %v1020, 0.0
        %1022 = vadd.xlane.f32.xlu0 %v1021
        %v1023 = vpop.xlane.xlu0 %1022
        %v1024 = vmul.f32 %v1023, %v1017
        %v1025 = vadd.f32 %v1024, 1e-05
        %v1026 = vrsqrt.pop %v1025
        %v1027 = vmul.f32 %v1019, %v1026
        %v1029 = vlaneseq
        %v1030 = vshrl.u32 %v1029, 7
        %v1031 = vsub.s32 0, %v1030
        %v1032 = vrot.slane %v1011, %v1031
        %v1034 = vmul.f32 %v1027, %v1032
        %v1036 = vlaneseq
        %v1037 = vshrl.u32 %v1036, 7
        %v1038 = vsub.s32 0, %v1037
        %v1039 = vrot.slane %v1012, %v1038
        %v1041 = vadd.f32 %v1034, %v1039
        %v1042 = vld [vmem:[%s577] sm:$0xff]
        %v1043 = vadd.f32 %v1042, %v1041
        %v1044 = vld [vmem:[%s8] sm:$0x1]
        %v1045 = vld [vmem:[%s9] sm:$0x1]
        %v1046 = vsel %vm1013, %v1043, 0.0
        %1047 = vadd.xlane.f32.xlu0 %v1046
        %v1048 = vpop.xlane.xlu0 %1047
        %v1049 = vmul.f32 %v1048, %v1017
        %v1050 = vsub.f32 %v1043, %v1049
        %v1051 = vmul.f32 %v1050, %v1050
        %v1052 = vsel %vm1013, %v1051, 0.0
        %1053 = vadd.xlane.f32.xlu0 %v1052
        %v1054 = vpop.xlane.xlu0 %1053
        %v1055 = vmul.f32 %v1054, %v1017
        %v1056 = vadd.f32 %v1055, 1e-05
        %v1057 = vrsqrt.pop %v1056
        %v1058 = vmul.f32 %v1050, %v1057
        %v1060 = vlaneseq
        %v1061 = vshrl.u32 %v1060, 7
        %v1062 = vsub.s32 0, %v1061
        %v1063 = vrot.slane %v1044, %v1062
        %v1065 = vmul.f32 %v1058, %v1063
        %v1067 = vlaneseq
        %v1068 = vshrl.u32 %v1067, 7
        %v1069 = vsub.s32 0, %v1068
        %v1070 = vrot.slane %v1045, %v1069
        %v1072 = vadd.f32 %v1065, %v1070
        %v1073 = vpack.c.bf16 %v1072, %v1072
        %v1074 = vld [vmem:[%s10] sm:$0xf]
        %v1075 = vld [vmem:[%s10 + $0x4] sm:$0xf]
        %v1076 = vld [vmem:[%s10 + $0x8] sm:$0xf]
        %v1077 = vld [vmem:[%s10 + $0xc] sm:$0xf]
        %v1078 = vld [vmem:[%s11] sm:$0x1]
        %v1080 = vlaneseq
        %v1081 = vshrl.u32 %v1080, 7
        %v1082 = vsub.s32 0, %v1081
        %v1083 = vrot.slane %v1078, %v1082
        %v1089 = vunpack.c.l.b16 %v1074
        %v1090 = vunpack.c.l.b16 %v1075
        %v1091 = vunpack.c.l.b16 %v1076
        %v1092 = vunpack.c.l.b16 %v1077
        %v1093 = vpack.c.b16 %v1090, %v1089
        %v1094 = vpack.c.b16 %v1092, %v1091
        %v1098 = vsel %vm1013, %v1073, 0
        %1100 = vmatprep.subr.bf16.mxu0 0
        %1101 = vmatpush1.bf16.msra.mxu0 %v1093
        %1102 = vmatprep.subr.bf16.mxu0 0
        %1103 = vmatpush1.bf16.msra.mxu0 %v1094
        %1104 = vmatprep.subr.bf16.mxu0 0
        %1105 = vmatpush1.bf16.msra.mxu0 0
        %1106 = vmatprep.subr.bf16.mxu0 0
        %1107 = vmatpush1.bf16.msra.mxu0 0
        %1108 = vmatprep.subr.bf16.mxu0 0
        %1109 = vmatpush1.bf16.msra.mxu0 0
        %1110 = vmatprep.subr.bf16.mxu0 0
        %1111 = vmatpush1.bf16.msra.mxu0 0
        %1112 = vmatprep.subr.bf16.mxu0 0
        %1113 = vmatpush1.bf16.msra.mxu0 0
        %1114 = vmatprep.subr.bf16.mxu0 0
        %1115 = vmatpush1.bf16.msra.mxu0 0
        %1116 = vmatprep.subr.bf16.mxu0 0
        %1117 = vmatpush1.bf16.msra.mxu0 0
        %1118 = vmatprep.subr.bf16.mxu0 0
        %1119 = vmatpush1.bf16.msra.mxu0 0
        %1120 = vmatprep.subr.bf16.mxu0 0
        %1121 = vmatpush1.bf16.msra.mxu0 0
        %1122 = vmatprep.subr.bf16.mxu0 0
        %1123 = vmatpush1.bf16.msra.mxu0 0
        %1124 = vmatprep.subr.bf16.mxu0 0
        %1125 = vmatpush1.bf16.msra.mxu0 0
        %1126 = vmatprep.subr.bf16.mxu0 0
        %1127 = vmatpush1.bf16.msra.mxu0 0
        %1128 = vmatprep.subr.bf16.mxu0 0
        %1129 = vmatpush1.bf16.msra.mxu0 0
        %1130 = vmatprep.subr.bf16.mxu0 0
        %1131 = vmatpush1.bf16.msra.mxu0 0
        %1132 = vmatprep.mubr.bf16.mxu0 0
        %1133 = vmatmul.mubr.bf16.gmra.mrb[0].mxu0 %v1098
        %v1134 = vpop.f32.mrb[0].mxu0
        %v1135 = vadd.f32 %v1083, %v1134
        %v1136 = vpop.f32.mrb[0].mxu0
        %v1137 = vpop.f32.mrb[0].mxu0
        %v1138 = vpop.f32.mrb[0].mxu0
        %1139 = vdwg.mxu0
        %v1140 = vmax.f32 %v1135, 0.0
        %v1141 = vpack.c.bf16 %v1140, %v1140
        %v1142 = vld [vmem:[%s12] sm:$0xf]
        %v1143 = vld [vmem:[%s12 + $0x4] sm:$0xf]
        %v1144 = vld [vmem:[%s12 + $0x8] sm:$0xf]
        %v1145 = vld [vmem:[%s12 + $0xc] sm:$0xf]
        %v1146 = vld [vmem:[%s13] sm:$0x1]
        %v1148 = vlaneseq
        %v1149 = vshrl.u32 %v1148, 7
        %v1150 = vsub.s32 0, %v1149
        %v1151 = vrot.slane %v1146, %v1150
        %v1157 = vunpack.c.l.b16 %v1142
        %v1158 = vunpack.c.l.b16 %v1143
        %v1159 = vunpack.c.l.b16 %v1144
        %v1160 = vunpack.c.l.b16 %v1145
        %v1161 = vpack.c.b16 %v1158, %v1157
        %v1162 = vpack.c.b16 %v1160, %v1159
        %v1166 = vsel %vm1013, %v1141, 0
        %1168 = vmatprep.subr.bf16.mxu0 0
        %1169 = vmatpush1.bf16.msra.mxu0 %v1161
        %1170 = vmatprep.subr.bf16.mxu0 0
        %1171 = vmatpush1.bf16.msra.mxu0 %v1162
        %1172 = vmatprep.subr.bf16.mxu0 0
        %1173 = vmatpush1.bf16.msra.mxu0 0
        %1174 = vmatprep.subr.bf16.mxu0 0
        %1175 = vmatpush1.bf16.msra.mxu0 0
        %1176 = vmatprep.subr.bf16.mxu0 0
        %1177 = vmatpush1.bf16.msra.mxu0 0
        %1178 = vmatprep.subr.bf16.mxu0 0
        %1179 = vmatpush1.bf16.msra.mxu0 0
        %1180 = vmatprep.subr.bf16.mxu0 0
        %1181 = vmatpush1.bf16.msra.mxu0 0
        %1182 = vmatprep.subr.bf16.mxu0 0
        %1183 = vmatpush1.bf16.msra.mxu0 0
        %1184 = vmatprep.subr.bf16.mxu0 0
        %1185 = vmatpush1.bf16.msra.mxu0 0
        %1186 = vmatprep.subr.bf16.mxu0 0
        %1187 = vmatpush1.bf16.msra.mxu0 0
        %1188 = vmatprep.subr.bf16.mxu0 0
        %1189 = vmatpush1.bf16.msra.mxu0 0
        %1190 = vmatprep.subr.bf16.mxu0 0
        %1191 = vmatpush1.bf16.msra.mxu0 0
        %1192 = vmatprep.subr.bf16.mxu0 0
        %1193 = vmatpush1.bf16.msra.mxu0 0
        %1194 = vmatprep.subr.bf16.mxu0 0
        %1195 = vmatpush1.bf16.msra.mxu0 0
        %1196 = vmatprep.subr.bf16.mxu0 0
        %1197 = vmatpush1.bf16.msra.mxu0 0
        %1198 = vmatprep.subr.bf16.mxu0 0
        %1199 = vmatpush1.bf16.msra.mxu0 0
        %1200 = vmatprep.mubr.bf16.mxu0 0
        %1201 = vmatmul.mubr.bf16.gmra.mrb[0].mxu0 %v1166
        %v1202 = vpop.f32.mrb[0].mxu0
        %v1203 = vadd.f32 %v1151, %v1202
        %v1204 = vpop.f32.mrb[0].mxu0
        %v1205 = vpop.f32.mrb[0].mxu0
        %v1206 = vpop.f32.mrb[0].mxu0
        %1207 = vdwg.mxu0
        %v1208 = vadd.f32 %v1043, %v1203
        %1209 = vst.msk [vmem:[%s584] sm:$0xff] %vm1013, %v1208
      $region84: #{full_transformer_encoder.8} parent=75 // pred_fallthru
        _
      %p1210 = scmp.lt.s32.totalorder %s30, 1
      %s1211 = scalar_select %p1210, %s30, 1
      %p1212 = scmp.lt.s32.totalorder %s31, 0
      %s1213 = scalar_select %p1212, %s31, 0
      %s1214 = sadd.s32 %s1213, %s1211
      %s1215 = smul.addr %s1214, 8
      %s1216 = scalar_lea.vmem %s14, %s1215
      // Predicated region
      $region85: #{full_transformer_encoder.8} parent=75 // pred_check
        %p1217 = pneg %p386
      $region86: #{full_transformer_encoder.8} parent=75 // pred_check_branch
        %1219 = sbr.rel (%p1217) target = $region88
      $region87: #{full_transformer_encoder.8} parent=75 // pred_region
        _
      $region88: #{full_transformer_encoder.8} parent=75 // pred_fallthru
        _
    $region76: #{full_transformer_encoder.8} parent=5 // pred_fallthru
      _
    %p1220 = scmp.le.s32.totalorder 2, %s20
    // Predicated region
    $region89: #{full_transformer_encoder.8} parent=5 // pred_check
      %p1221 = pneg %p1220
    $region90: #{full_transformer_encoder.8} parent=5 // pred_check_branch
      %1223 = sbr.rel (%p1221) target = $region92
    $region91: #{full_transformer_encoder.8} parent=5 // pred_region
      %s1224 = ssub.s32 %s20, 2
      // Predicated region
      $region93: #{full_transformer_encoder.8} parent=91 // pred_check
        %p1225 = pneg %p392
      $region94: #{full_transformer_encoder.8} parent=91 // pred_check_branch
        %1227 = sbr.rel (%p1225) target = $region96
      $region95: #{full_transformer_encoder.8} parent=91 // pred_region
        %p1228 = scmp.lt.s32.totalorder %s33, 1
        %s1229 = scalar_select %p1228, %s33, 1
        %p1230 = scmp.lt.s32.totalorder %s34, 0
        %s1231 = scalar_select %p1230, %s34, 0
        %s1232 = sadd.s32 %s1231, %s1229
        %s1233 = smul.addr %s1232, 8
        %s1234 = scalar_lea.vmem %s14, %s1233
      $region96: #{full_transformer_encoder.8} parent=91 // pred_fallthru
        _
    $region92: #{full_transformer_encoder.8} parent=5 // pred_fallthru
      _
  $region6: #{full_transformer_encoder.8} parent=0 // loop_footer
    %s24 = sadd.s32 1, %s20
  $region7: #{full_transformer_encoder.8} parent=0 // loop_footer_branch
    %19 = sbr.rel target = $region3
  $region8: #{full_transformer_encoder.8} parent=0 // loop_exit
    _

</llo_original>
